<compile_context>
chip_gen: v7x
topology: tpu7x:2x2x1
jax: 0.10.0
libtpu: 0.0.40
codegen_flags: <defaults>
</compile_context>

<pallas_src>
import functools
import math

import jax
import jax.numpy as jnp
from jax.experimental import pallas as pl
from jax.experimental.pallas import tpu as pltpu

# Set to jnp.bfloat16 for production channel counts (accumulation stays f32).
MATMUL_DTYPE = jnp.float32


def _pcdp_kernel(x_ref, w1_ref, s1_ref, t1_ref, w2_ref, b2_ref,
                 w3_ref, s2_ref, t2_ref, out_ref, xp_ref, col_ref, *, H, W):
    """One batch element per grid step, channels-first, spatial on lanes.

    x_ref  : (1, C, N)        input image, N = H*W flattened on lanes
    w1_ref : (C, 9C)          3x3 conv #1, rows = out-channel, cols = (tap, in-ch)
    w2_ref : (C, C)           1x1 conv, [Cout, Cin]
    w3_ref : (C, 9C)          3x3 conv #2
    s*,t*  : (C, 1)           folded BatchNorm scale / (shift + conv bias)
    b2_ref : (C, 1)           1x1 conv bias
    out_ref: (1, C, N)
    xp_ref : (C, N + 2W + 2)  guard-padded flat image scratch (reused for both convs)
    col_ref: (9C, N)          im2col scratch
    """
    C = x_ref.shape[1]
    N = H * W
    off0 = W + 1                    # interior start inside the guard buffer

    # Column-id masks for the +-1 horizontal taps: the flat guard buffer has
    # no per-row W padding, so wrap-around reads are zeroed here instead.
    col_id = jax.lax.broadcasted_iota(jnp.int32, (1, N), 1) % W
    mask_l = (col_id != 0).astype(jnp.float32)        # tap reads column x-1
    mask_r = (col_id != (W - 1)).astype(jnp.float32)  # tap reads column x+1

    x = x_ref[0]                                      # (C, N), lane-dense load

    # Zero the tiny guard buffer once per grid step (guards are never written
    # again; interior is fully overwritten by each conv below).  Per-step
    # zeroing keeps v7x megacore safe (each core has a private scratch).
    xp_ref[...] = jnp.zeros_like(xp_ref)

    def conv3x3(src, w_ref):
        # Stage the source image into the guard-padded flat buffer.
        xp_ref[:, off0:off0 + N] = src
        # im2col: 9 contiguous lane-offset slices -> (9C, N), one MXU matmul.
        for k in range(9):
            dy, dx = k // 3, k % 3                    # ky, kx in 0..2
            start = dy * W + dx                       # = off0 + (dy-1)*W + (dx-1)
            tap = xp_ref[:, start:start + N]
            if dx == 0:
                tap = tap * mask_l
            elif dx == 2:
                tap = tap * mask_r
            col_ref[k * C:(k + 1) * C, :] = tap
        return jnp.dot(w_ref[...].astype(MATMUL_DTYPE),
                       col_ref[...].astype(MATMUL_DTYPE),
                       preferred_element_type=jnp.float32)

    # residual[0]: DPConv3x3 + BN (conv bias folded into t1) + ReLU
    h1 = jnp.maximum(conv3x3(x, w1_ref) * s1_ref[...] + t1_ref[...], 0.0)

    # residual[1]: 1x1 conv + bias (single matmul, lane-dense on N)
    h2 = jnp.dot(w2_ref[...].astype(MATMUL_DTYPE), h1.astype(MATMUL_DTYPE),
                 preferred_element_type=jnp.float32) + b2_ref[...]

    # residual[2]: DPConv3x3 + BN + ReLU (guard buffer reused, guards still 0)
    h3 = jnp.maximum(conv3x3(h2, w3_ref) * s2_ref[...] + t2_ref[...], 0.0)

    # identity shortcut + AddLayer, lane-dense store
    out_ref[0] = (h3 + x).astype(out_ref.dtype)


def pcdp_block4_forward(x_nchw, kparams):
    """x_nchw: (B, C, H, W) float32. Returns (B, C, H, W). No transposes."""
    B, C, H, W = x_nchw.shape
    N = H * W
    L = N + 2 * W + 2
    x = x_nchw.reshape(B, C, N).astype(jnp.float32)   # free reshape, stays NCHW

    (w1_mat, s1, t1f, w2_mat, b2c, w3_mat, s2, t2f) = kparams

    io_blk = (1, C, N)
    in_specs = [
        pl.BlockSpec(io_blk, lambda b: (b, 0, 0)),        # x: one image per step
        pl.BlockSpec(w1_mat.shape, lambda b: (0, 0)),     # weights / BN params
        pl.BlockSpec(s1.shape, lambda b: (0, 0)),         # stay VMEM-resident
        pl.BlockSpec(t1f.shape, lambda b: (0, 0)),        # via constant maps
        pl.BlockSpec(w2_mat.shape, lambda b: (0, 0)),
        pl.BlockSpec(b2c.shape, lambda b: (0, 0)),
        pl.BlockSpec(w3_mat.shape, lambda b: (0, 0)),
        pl.BlockSpec(s2.shape, lambda b: (0, 0)),
        pl.BlockSpec(t2f.shape, lambda b: (0, 0)),
    ]
    out_specs = pl.BlockSpec(io_blk, lambda b: (b, 0, 0))

    # Per-step VMEM footprint: double-buffered in/out tiles + scratches +
    # params + f32 temps.  Cap from the chip's physical VMEM with headroom
    # (~56 MiB-class on v7x, ~112 MiB on v5e/v6e) instead of a hard-coded 64 MiB.
    tile_b = C * N * 4
    scratch_b = (C * L + 9 * C * N) * 4
    par_b = sum(int(p.size) * 4 for p in kparams)
    need = 4 * tile_b + scratch_b + par_b + 8 * tile_b
    try:
        cap = int(pltpu.get_tpu_info().vmem_capacity_bytes)
    except Exception:
        cap = 64 * 1024 * 1024            # v7x floor if the query is unavailable
    vmem_limit = int(min(max(4 * need, 4 * 1024 * 1024), (cap * 7) // 8))

    out = pl.pallas_call(
        functools.partial(_pcdp_kernel, H=H, W=W),
        out_shape=jax.ShapeDtypeStruct((B, C, N), jnp.float32),
        grid_spec=pltpu.PrefetchScalarGridSpec(
            num_scalar_prefetch=0,
            grid=(B,),
            in_specs=in_specs,
            out_specs=out_specs,
            scratch_shapes=[pltpu.VMEM((C, L), jnp.float32),       # guard buffer
                            pltpu.VMEM((9 * C, N), jnp.float32)],  # im2col
        ),
        compiler_params=pltpu.CompilerParams(
            dimension_semantics=("parallel",),   # batch splits across TCs (v7x)
            vmem_limit_bytes=vmem_limit,
        ),
    )(x, w1_mat, s1, t1f, w2_mat, b2c, w3_mat, s2, t2f)

    return out.reshape(B, C, H, W)


def init_params(key, C, eps=1e-5):
    """Deterministic init matching PCDPBlock4._initialize_weights (eval-mode BN).

    3x3 weights are pre-reshaped to (Cout, 9*Cin) for the single im2col matmul;
    conv biases are folded into the BN shift (t' = t + s * b).
    """
    k1, k2, k3 = jax.random.split(key, 3)
    # kaiming_normal_(mode='fan_out', nonlinearity='relu'): std = sqrt(2/(O*kh*kw))
    std3 = math.sqrt(2.0 / (C * 3 * 3))
    std1 = math.sqrt(2.0 / (C * 1 * 1))
    w1_oihw = jax.random.normal(k1, (C, C, 3, 3), jnp.float32) * std3
    w2_oihw = jax.random.normal(k2, (C, C, 1, 1), jnp.float32) * std1
    w3_oihw = jax.random.normal(k3, (C, C, 3, 3), jnp.float32) * std3

    # (O, I, ky, kx) -> (O, ky, kx, I) -> (O, 9I); matches col rows k*C + i
    w1_mat = jnp.transpose(w1_oihw, (0, 2, 3, 1)).reshape(C, 9 * C)
    w3_mat = jnp.transpose(w3_oihw, (0, 2, 3, 1)).reshape(C, 9 * C)
    w2_mat = w2_oihw[:, :, 0, 0]                         # (Cout, Cin)

    # conv biases -> 0 per _initialize_weights
    b1 = jnp.zeros((C,), jnp.float32)
    b2 = jnp.zeros((C,), jnp.float32)
    b3 = jnp.zeros((C,), jnp.float32)

    # BatchNorm eval mode: gamma=1, beta=0, running_mean=0, running_var=1
    gamma = jnp.ones((C,), jnp.float32)
    beta = jnp.zeros((C,), jnp.float32)
    mean = jnp.zeros((C,), jnp.float32)
    var = jnp.ones((C,), jnp.float32)
    s = gamma / jnp.sqrt(var + eps)
    t = beta - mean * s

    s1 = s.reshape(C, 1)
    t1f = (t + s * b1).reshape(C, 1)     # fold DPConv bias into BN shift
    s2 = s.reshape(C, 1)
    t2f = (t + s * b3).reshape(C, 1)
    b2c = b2.reshape(C, 1)

    kparams = (w1_mat, s1, t1f, w2_mat, b2c, w3_mat, s2, t2f)

    # reference params (HWIO weights for lax.conv)
    w1_hwio = jnp.transpose(w1_oihw, (2, 3, 1, 0))
    w3_hwio = jnp.transpose(w3_oihw, (2, 3, 1, 0))
    ref_params = (w1_hwio, b1, s, t, w2_oihw[:, :, 0, 0].T, b2, w3_hwio, b3, s, t)
    return kparams, ref_params


def reference_forward(x_nchw, ref_params):
    """Pure-JAX reference (lax conv) for correctness check."""
    (w1_hwio, b1, s1, t1, w2_io, b2, w3_hwio, b3, s2, t2) = ref_params
    x = jnp.transpose(x_nchw, (0, 2, 3, 1)).astype(jnp.float32)

    def conv3(v, w, b):
        y = jax.lax.conv_general_dilated(
            v, w, window_strides=(1, 1), padding=((1, 1), (1, 1)),
            dimension_numbers=("NHWC", "HWIO", "NHWC"))
        return y + b

    h1 = jnp.maximum(conv3(x, w1_hwio, b1) * s1 + t1, 0.0)
    h2 = jnp.einsum("bhwc,cd->bhwd", h1, w2_io) + b2
    h3 = jnp.maximum(conv3(h2, w3_hwio, b3) * s2 + t2, 0.0)
    out = h3 + x
    return jnp.transpose(out, (0, 3, 1, 2))


if __name__ == "__main__":
    key = jax.random.PRNGKey(0)
    kx, kp = jax.random.split(key)

    B, C, H, W = 2, 4, 16, 16
    x = jax.random.normal(kx, (B, C, H, W), jnp.float32)

    kparams, ref_params = init_params(kp, C)

    out = jax.block_until_ready(pcdp_block4_forward(x, kparams))
    ref = jax.block_until_ready(reference_forward(x, ref_params))

    assert out.shape == (B, C, H, W)
    err = jnp.max(jnp.abs(out - ref))
    assert jnp.allclose(out, ref, atol=1e-4, rtol=1e-4), f"max abs err {err}"

    print("KERNEL_OK")
</pallas_src>

<mosaic_0001>
module attributes {stable_mosaic.version = 11 : i64} {
  func.func @_pcdp_kernel(%arg0: i32, %arg1: memref<1x4x256xf32, #tpu.memory_space<vmem>>, %arg2: memref<4x36xf32, #tpu.memory_space<vmem>>, %arg3: memref<4x1xf32, #tpu.memory_space<vmem>>, %arg4: memref<4x1xf32, #tpu.memory_space<vmem>>, %arg5: memref<4x4xf32, #tpu.memory_space<vmem>>, %arg6: memref<4x1xf32, #tpu.memory_space<vmem>>, %arg7: memref<4x36xf32, #tpu.memory_space<vmem>>, %arg8: memref<4x1xf32, #tpu.memory_space<vmem>>, %arg9: memref<4x1xf32, #tpu.memory_space<vmem>>, %arg10: memref<1x4x256xf32, #tpu.memory_space<vmem>>, %arg11: memref<4x290xf32, #tpu.memory_space<vmem>>, %arg12: memref<36x256xf32, #tpu.memory_space<vmem>>) attributes {dimension_semantics = [#tpu.dimension_semantics<parallel>], iteration_bounds = array<i64: 2>, scalar_prefetch = 0 : i64, scratch_operands = 2 : i64, tpu.core_type = #tpu.core_type<tc>, window_params = [{transform_indices = @transform_0, window_bounds = array<i64: 1, 4, 256>}, {pipeline_mode = #tpu.pipeline_mode<synchronous>, transform_indices = @transform_1, window_bounds = array<i64: 4, 36>}, {pipeline_mode = #tpu.pipeline_mode<synchronous>, transform_indices = @transform_2, window_bounds = array<i64: 4, 1>}, {pipeline_mode = #tpu.pipeline_mode<synchronous>, transform_indices = @transform_3, window_bounds = array<i64: 4, 1>}, {pipeline_mode = #tpu.pipeline_mode<synchronous>, transform_indices = @transform_4, window_bounds = array<i64: 4, 4>}, {pipeline_mode = #tpu.pipeline_mode<synchronous>, transform_indices = @transform_5, window_bounds = array<i64: 4, 1>}, {pipeline_mode = #tpu.pipeline_mode<synchronous>, transform_indices = @transform_6, window_bounds = array<i64: 4, 36>}, {pipeline_mode = #tpu.pipeline_mode<synchronous>, transform_indices = @transform_7, window_bounds = array<i64: 4, 1>}, {pipeline_mode = #tpu.pipeline_mode<synchronous>, transform_indices = @transform_8, window_bounds = array<i64: 4, 1>}, {transform_indices = @transform_9, window_bounds = array<i64: 1, 4, 256>}]} {
    %0 = tpu.iota {dimensions = array<i32: 1>} : vector<1x256xi32>
    %c16_i32 = arith.constant 16 : i32
    %c0_i32 = arith.constant 0 : i32
    %1 = arith.cmpi eq, %c16_i32, %c0_i32 : i32
    %c1_i32 = arith.constant 1 : i32
    %2 = arith.select %1, %c1_i32, %c16_i32 : i32
    %3 = vector.broadcast %2 : i32 to vector<1x256xi32>
    %4 = arith.remsi %0, %3 : vector<1x256xi32>
    %c0_i32_0 = arith.constant 0 : i32
    %5 = vector.broadcast %c0_i32_0 : i32 to vector<1x256xi32>
    %6 = arith.cmpi ne, %4, %5 : vector<1x256xi32>
    %c0_i32_1 = arith.constant 0 : i32
    %7 = vector.broadcast %c0_i32_1 : i32 to vector<1x256xi32>
    %8 = arith.cmpi slt, %4, %7 : vector<1x256xi32>
    %c0_i32_2 = arith.constant 0 : i32
    %9 = arith.cmpi slt, %2, %c0_i32_2 : i32
    %10 = vector.broadcast %9 : i1 to vector<1x256xi1>
    %11 = vector.broadcast %10 : vector<1x256xi1> to vector<1x256xi1>
    %12 = arith.xori %8, %11 : vector<1x256xi1>
    %13 = arith.andi %12, %6 : vector<1x256xi1>
    %14 = vector.broadcast %2 : i32 to vector<1x256xi32>
    %15 = arith.addi %4, %14 : vector<1x256xi32>
    %16 = arith.select %13, %15, %4 : vector<1x256xi1>, vector<1x256xi32>
    %c0_i32_3 = arith.constant 0 : i32
    %17 = vector.broadcast %c0_i32_3 : i32 to vector<1x256xi32>
    %18 = arith.cmpi ne, %16, %17 : vector<1x256xi32>
    %19 = arith.extui %18 : vector<1x256xi1> to vector<1x256xi32>
    %20 = arith.sitofp %19 : vector<1x256xi32> to vector<1x256xf32>
    %c15_i32 = arith.constant 15 : i32
    %21 = vector.broadcast %c15_i32 : i32 to vector<1x256xi32>
    %22 = arith.cmpi ne, %16, %21 : vector<1x256xi32>
    %23 = arith.extui %22 : vector<1x256xi1> to vector<1x256xi32>
    %24 = arith.sitofp %23 : vector<1x256xi32> to vector<1x256xf32>
    %c0 = arith.constant 0 : index
    %c0_4 = arith.constant 0 : index
    %c0_5 = arith.constant 0 : index
    %25 = vector.load %arg1[%c0, %c0_4, %c0_5] : memref<1x4x256xf32, #tpu.memory_space<vmem>>, vector<1x4x256xf32>
    %26 = vector.shape_cast %25 : vector<1x4x256xf32> to vector<4x256xf32>
    %cst = arith.constant 0.000000e+00 : f32
    %27 = vector.broadcast %cst : f32 to vector<4x290xf32>
    %c0_6 = arith.constant 0 : index
    %c0_7 = arith.constant 0 : index
    %28 = vector.load %arg11[%c0_6, %c0_7] : memref<4x290xf32, #tpu.memory_space<vmem>>, vector<4x290xf32>
    tpu.vector_store %arg11[%c0_6, %c0_7], %27 {strides = array<i32>} : memref<4x290xf32, #tpu.memory_space<vmem>>, vector<4x290xf32>,
    %c0_8 = arith.constant 0 : index
    %c17 = arith.constant 17 : index
    %29 = vector.load %arg11[%c0_8, %c17] : memref<4x290xf32, #tpu.memory_space<vmem>>, vector<4x256xf32>
    tpu.vector_store %arg11[%c0_8, %c17], %26 {strides = array<i32>} : memref<4x290xf32, #tpu.memory_space<vmem>>, vector<4x256xf32>,
    %c0_9 = arith.constant 0 : index
    %c0_10 = arith.constant 0 : index
    %30 = vector.load %arg11[%c0_9, %c0_10] : memref<4x290xf32, #tpu.memory_space<vmem>>, vector<4x256xf32>
    %31 = vector.broadcast %20 : vector<1x256xf32> to vector<4x256xf32>
    %32 = arith.mulf %30, %31 : vector<4x256xf32>
    %c0_11 = arith.constant 0 : index
    %c0_12 = arith.constant 0 : index
    %33 = vector.load %arg12[%c0_11, %c0_12] : memref<36x256xf32, #tpu.memory_space<vmem>>, vector<4x256xf32>
    tpu.vector_store %arg12[%c0_11, %c0_12], %32 {strides = array<i32>} : memref<36x256xf32, #tpu.memory_space<vmem>>, vector<4x256xf32>,
    %c0_13 = arith.constant 0 : index
    %c1 = arith.constant 1 : index
    %34 = vector.load %arg11[%c0_13, %c1] : memref<4x290xf32, #tpu.memory_space<vmem>>, vector<4x256xf32>
    %c4 = arith.constant 4 : index
    %c0_14 = arith.constant 0 : index
    %35 = vector.load %arg12[%c4, %c0_14] : memref<36x256xf32, #tpu.memory_space<vmem>>, vector<4x256xf32>
    tpu.vector_store %arg12[%c4, %c0_14], %34 {strides = array<i32>} : memref<36x256xf32, #tpu.memory_space<vmem>>, vector<4x256xf32>,
    %c0_15 = arith.constant 0 : index
    %c2 = arith.constant 2 : index
    %36 = vector.load %arg11[%c0_15, %c2] : memref<4x290xf32, #tpu.memory_space<vmem>>, vector<4x256xf32>
    %37 = vector.broadcast %24 : vector<1x256xf32> to vector<4x256xf32>
    %38 = arith.mulf %36, %37 : vector<4x256xf32>
    %c8 = arith.constant 8 : index
    %c0_16 = arith.constant 0 : index
    %39 = vector.load %arg12[%c8, %c0_16] : memref<36x256xf32, #tpu.memory_space<vmem>>, vector<4x256xf32>
    tpu.vector_store %arg12[%c8, %c0_16], %38 {strides = array<i32>} : memref<36x256xf32, #tpu.memory_space<vmem>>, vector<4x256xf32>,
    %c0_17 = arith.constant 0 : index
    %c16 = arith.constant 16 : index
    %40 = vector.load %arg11[%c0_17, %c16] : memref<4x290xf32, #tpu.memory_space<vmem>>, vector<4x256xf32>
    %41 = vector.broadcast %20 : vector<1x256xf32> to vector<4x256xf32>
    %42 = arith.mulf %40, %41 : vector<4x256xf32>
    %c12 = arith.constant 12 : index
    %c0_18 = arith.constant 0 : index
    %43 = vector.load %arg12[%c12, %c0_18] : memref<36x256xf32, #tpu.memory_space<vmem>>, vector<4x256xf32>
    tpu.vector_store %arg12[%c12, %c0_18], %42 {strides = array<i32>} : memref<36x256xf32, #tpu.memory_space<vmem>>, vector<4x256xf32>,
    %c0_19 = arith.constant 0 : index
    %c17_20 = arith.constant 17 : index
    %44 = vector.load %arg11[%c0_19, %c17_20] : memref<4x290xf32, #tpu.memory_space<vmem>>, vector<4x256xf32>
    %c16_21 = arith.constant 16 : index
    %c0_22 = arith.constant 0 : index
    %45 = vector.load %arg12[%c16_21, %c0_22] : memref<36x256xf32, #tpu.memory_space<vmem>>, vector<4x256xf32>
    tpu.vector_store %arg12[%c16_21, %c0_22], %44 {strides = array<i32>} : memref<36x256xf32, #tpu.memory_space<vmem>>, vector<4x256xf32>,
    %c0_23 = arith.constant 0 : index
    %c18 = arith.constant 18 : index
    %46 = vector.load %arg11[%c0_23, %c18] : memref<4x290xf32, #tpu.memory_space<vmem>>, vector<4x256xf32>
    %47 = vector.broadcast %24 : vector<1x256xf32> to vector<4x256xf32>
    %48 = arith.mulf %46, %47 : vector<4x256xf32>
    %c20 = arith.constant 20 : index
    %c0_24 = arith.constant 0 : index
    %49 = vector.load %arg12[%c20, %c0_24] : memref<36x256xf32, #tpu.memory_space<vmem>>, vector<4x256xf32>
    tpu.vector_store %arg12[%c20, %c0_24], %48 {strides = array<i32>} : memref<36x256xf32, #tpu.memory_space<vmem>>, vector<4x256xf32>,
    %c0_25 = arith.constant 0 : index
    %c32 = arith.constant 32 : index
    %50 = vector.load %arg11[%c0_25, %c32] : memref<4x290xf32, #tpu.memory_space<vmem>>, vector<4x256xf32>
    %51 = vector.broadcast %20 : vector<1x256xf32> to vector<4x256xf32>
    %52 = arith.mulf %50, %51 : vector<4x256xf32>
    %c24 = arith.constant 24 : index
    %c0_26 = arith.constant 0 : index
    %53 = vector.load %arg12[%c24, %c0_26] : memref<36x256xf32, #tpu.memory_space<vmem>>, vector<4x256xf32>
    tpu.vector_store %arg12[%c24, %c0_26], %52 {strides = array<i32>} : memref<36x256xf32, #tpu.memory_space<vmem>>, vector<4x256xf32>,
    %c0_27 = arith.constant 0 : index
    %c33 = arith.constant 33 : index
    %54 = vector.load %arg11[%c0_27, %c33] : memref<4x290xf32, #tpu.memory_space<vmem>>, vector<4x256xf32>
    %c28 = arith.constant 28 : index
    %c0_28 = arith.constant 0 : index
    %55 = vector.load %arg12[%c28, %c0_28] : memref<36x256xf32, #tpu.memory_space<vmem>>, vector<4x256xf32>
    tpu.vector_store %arg12[%c28, %c0_28], %54 {strides = array<i32>} : memref<36x256xf32, #tpu.memory_space<vmem>>, vector<4x256xf32>,
    %c0_29 = arith.constant 0 : index
    %c34 = arith.constant 34 : index
    %56 = vector.load %arg11[%c0_29, %c34] : memref<4x290xf32, #tpu.memory_space<vmem>>, vector<4x256xf32>
    %57 = vector.broadcast %24 : vector<1x256xf32> to vector<4x256xf32>
    %58 = arith.mulf %56, %57 : vector<4x256xf32>
    %c32_30 = arith.constant 32 : index
    %c0_31 = arith.constant 0 : index
    %59 = vector.load %arg12[%c32_30, %c0_31] : memref<36x256xf32, #tpu.memory_space<vmem>>, vector<4x256xf32>
    tpu.vector_store %arg12[%c32_30, %c0_31], %58 {strides = array<i32>} : memref<36x256xf32, #tpu.memory_space<vmem>>, vector<4x256xf32>,
    %c0_32 = arith.constant 0 : index
    %c0_33 = arith.constant 0 : index
    %60 = vector.load %arg2[%c0_32, %c0_33] : memref<4x36xf32, #tpu.memory_space<vmem>>, vector<4x36xf32>
    %c0_34 = arith.constant 0 : index
    %c0_35 = arith.constant 0 : index
    %61 = vector.load %arg12[%c0_34, %c0_35] : memref<36x256xf32, #tpu.memory_space<vmem>>, vector<36x256xf32>
    %cst_36 = arith.constant dense<0.000000e+00> : vector<4x256xf32>
    %62 = tpu.matmul %60, %61, %cst_36 {dimension_numbers = #tpu.dot_dimension_numbers<[1], [0], [0], [1], [0, 0, 1, 1], [], []>} : vector<4x36xf32>, vector<36x256xf32>, vector<4x256xf32> -> vector<4x256xf32>
    %c0_37 = arith.constant 0 : index
    %c0_38 = arith.constant 0 : index
    %63 = vector.load %arg3[%c0_37, %c0_38] : memref<4x1xf32, #tpu.memory_space<vmem>>, vector<4x1xf32>
    %64 = vector.broadcast %63 : vector<4x1xf32> to vector<4x256xf32>
    %65 = arith.mulf %62, %64 : vector<4x256xf32>
    %c0_39 = arith.constant 0 : index
    %c0_40 = arith.constant 0 : index
    %66 = vector.load %arg4[%c0_39, %c0_40] : memref<4x1xf32, #tpu.memory_space<vmem>>, vector<4x1xf32>
    %67 = vector.broadcast %66 : vector<4x1xf32> to vector<4x256xf32>
    %68 = arith.addf %65, %67 : vector<4x256xf32>
    %cst_41 = arith.constant 0.000000e+00 : f32
    %69 = vector.broadcast %cst_41 : f32 to vector<4x256xf32>
    %70 = arith.maximumf %68, %69 : vector<4x256xf32>
    %c0_42 = arith.constant 0 : index
    %c0_43 = arith.constant 0 : index
    %71 = vector.load %arg5[%c0_42, %c0_43] : memref<4x4xf32, #tpu.memory_space<vmem>>, vector<4x4xf32>
    %cst_44 = arith.constant dense<0.000000e+00> : vector<4x256xf32>
    %72 = tpu.matmul %71, %70, %cst_44 {dimension_numbers = #tpu.dot_dimension_numbers<[1], [0], [0], [1], [0, 0, 1, 1], [], []>} : vector<4x4xf32>, vector<4x256xf32>, vector<4x256xf32> -> vector<4x256xf32>
    %c0_45 = arith.constant 0 : index
    %c0_46 = arith.constant 0 : index
    %73 = vector.load %arg6[%c0_45, %c0_46] : memref<4x1xf32, #tpu.memory_space<vmem>>, vector<4x1xf32>
    %74 = vector.broadcast %73 : vector<4x1xf32> to vector<4x256xf32>
    %75 = arith.addf %72, %74 : vector<4x256xf32>
    %c0_47 = arith.constant 0 : index
    %c17_48 = arith.constant 17 : index
    %76 = vector.load %arg11[%c0_47, %c17_48] : memref<4x290xf32, #tpu.memory_space<vmem>>, vector<4x256xf32>
    tpu.vector_store %arg11[%c0_47, %c17_48], %75 {strides = array<i32>} : memref<4x290xf32, #tpu.memory_space<vmem>>, vector<4x256xf32>,
    %c0_49 = arith.constant 0 : index
    %c0_50 = arith.constant 0 : index
    %77 = vector.load %arg11[%c0_49, %c0_50] : memref<4x290xf32, #tpu.memory_space<vmem>>, vector<4x256xf32>
    %78 = vector.broadcast %20 : vector<1x256xf32> to vector<4x256xf32>
    %79 = arith.mulf %77, %78 : vector<4x256xf32>
    %c0_51 = arith.constant 0 : index
    %c0_52 = arith.constant 0 : index
    %80 = vector.load %arg12[%c0_51, %c0_52] : memref<36x256xf32, #tpu.memory_space<vmem>>, vector<4x256xf32>
    tpu.vector_store %arg12[%c0_51, %c0_52], %79 {strides = array<i32>} : memref<36x256xf32, #tpu.memory_space<vmem>>, vector<4x256xf32>,
    %c0_53 = arith.constant 0 : index
    %c1_54 = arith.constant 1 : index
    %81 = vector.load %arg11[%c0_53, %c1_54] : memref<4x290xf32, #tpu.memory_space<vmem>>, vector<4x256xf32>
    %c4_55 = arith.constant 4 : index
    %c0_56 = arith.constant 0 : index
    %82 = vector.load %arg12[%c4_55, %c0_56] : memref<36x256xf32, #tpu.memory_space<vmem>>, vector<4x256xf32>
    tpu.vector_store %arg12[%c4_55, %c0_56], %81 {strides = array<i32>} : memref<36x256xf32, #tpu.memory_space<vmem>>, vector<4x256xf32>,
    %c0_57 = arith.constant 0 : index
    %c2_58 = arith.constant 2 : index
    %83 = vector.load %arg11[%c0_57, %c2_58] : memref<4x290xf32, #tpu.memory_space<vmem>>, vector<4x256xf32>
    %84 = vector.broadcast %24 : vector<1x256xf32> to vector<4x256xf32>
    %85 = arith.mulf %83, %84 : vector<4x256xf32>
    %c8_59 = arith.constant 8 : index
    %c0_60 = arith.constant 0 : index
    %86 = vector.load %arg12[%c8_59, %c0_60] : memref<36x256xf32, #tpu.memory_space<vmem>>, vector<4x256xf32>
    tpu.vector_store %arg12[%c8_59, %c0_60], %85 {strides = array<i32>} : memref<36x256xf32, #tpu.memory_space<vmem>>, vector<4x256xf32>,
    %c0_61 = arith.constant 0 : index
    %c16_62 = arith.constant 16 : index
    %87 = vector.load %arg11[%c0_61, %c16_62] : memref<4x290xf32, #tpu.memory_space<vmem>>, vector<4x256xf32>
    %88 = vector.broadcast %20 : vector<1x256xf32> to vector<4x256xf32>
    %89 = arith.mulf %87, %88 : vector<4x256xf32>
    %c12_63 = arith.constant 12 : index
    %c0_64 = arith.constant 0 : index
    %90 = vector.load %arg12[%c12_63, %c0_64] : memref<36x256xf32, #tpu.memory_space<vmem>>, vector<4x256xf32>
    tpu.vector_store %arg12[%c12_63, %c0_64], %89 {strides = array<i32>} : memref<36x256xf32, #tpu.memory_space<vmem>>, vector<4x256xf32>,
    %c0_65 = arith.constant 0 : index
    %c17_66 = arith.constant 17 : index
    %91 = vector.load %arg11[%c0_65, %c17_66] : memref<4x290xf32, #tpu.memory_space<vmem>>, vector<4x256xf32>
    %c16_67 = arith.constant 16 : index
    %c0_68 = arith.constant 0 : index
    %92 = vector.load %arg12[%c16_67, %c0_68] : memref<36x256xf32, #tpu.memory_space<vmem>>, vector<4x256xf32>
    tpu.vector_store %arg12[%c16_67, %c0_68], %91 {strides = array<i32>} : memref<36x256xf32, #tpu.memory_space<vmem>>, vector<4x256xf32>,
    %c0_69 = arith.constant 0 : index
    %c18_70 = arith.constant 18 : index
    %93 = vector.load %arg11[%c0_69, %c18_70] : memref<4x290xf32, #tpu.memory_space<vmem>>, vector<4x256xf32>
    %94 = vector.broadcast %24 : vector<1x256xf32> to vector<4x256xf32>
    %95 = arith.mulf %93, %94 : vector<4x256xf32>
    %c20_71 = arith.constant 20 : index
    %c0_72 = arith.constant 0 : index
    %96 = vector.load %arg12[%c20_71, %c0_72] : memref<36x256xf32, #tpu.memory_space<vmem>>, vector<4x256xf32>
    tpu.vector_store %arg12[%c20_71, %c0_72], %95 {strides = array<i32>} : memref<36x256xf32, #tpu.memory_space<vmem>>, vector<4x256xf32>,
    %c0_73 = arith.constant 0 : index
    %c32_74 = arith.constant 32 : index
    %97 = vector.load %arg11[%c0_73, %c32_74] : memref<4x290xf32, #tpu.memory_space<vmem>>, vector<4x256xf32>
    %98 = vector.broadcast %20 : vector<1x256xf32> to vector<4x256xf32>
    %99 = arith.mulf %97, %98 : vector<4x256xf32>
    %c24_75 = arith.constant 24 : index
    %c0_76 = arith.constant 0 : index
    %100 = vector.load %arg12[%c24_75, %c0_76] : memref<36x256xf32, #tpu.memory_space<vmem>>, vector<4x256xf32>
    tpu.vector_store %arg12[%c24_75, %c0_76], %99 {strides = array<i32>} : memref<36x256xf32, #tpu.memory_space<vmem>>, vector<4x256xf32>,
    %c0_77 = arith.constant 0 : index
    %c33_78 = arith.constant 33 : index
    %101 = vector.load %arg11[%c0_77, %c33_78] : memref<4x290xf32, #tpu.memory_space<vmem>>, vector<4x256xf32>
    %c28_79 = arith.constant 28 : index
    %c0_80 = arith.constant 0 : index
    %102 = vector.load %arg12[%c28_79, %c0_80] : memref<36x256xf32, #tpu.memory_space<vmem>>, vector<4x256xf32>
    tpu.vector_store %arg12[%c28_79, %c0_80], %101 {strides = array<i32>} : memref<36x256xf32, #tpu.memory_space<vmem>>, vector<4x256xf32>,
    %c0_81 = arith.constant 0 : index
    %c34_82 = arith.constant 34 : index
    %103 = vector.load %arg11[%c0_81, %c34_82] : memref<4x290xf32, #tpu.memory_space<vmem>>, vector<4x256xf32>
    %104 = vector.broadcast %24 : vector<1x256xf32> to vector<4x256xf32>
    %105 = arith.mulf %103, %104 : vector<4x256xf32>
    %c32_83 = arith.constant 32 : index
    %c0_84 = arith.constant 0 : index
    %106 = vector.load %arg12[%c32_83, %c0_84] : memref<36x256xf32, #tpu.memory_space<vmem>>, vector<4x256xf32>
    tpu.vector_store %arg12[%c32_83, %c0_84], %105 {strides = array<i32>} : memref<36x256xf32, #tpu.memory_space<vmem>>, vector<4x256xf32>,
    %c0_85 = arith.constant 0 : index
    %c0_86 = arith.constant 0 : index
    %107 = vector.load %arg7[%c0_85, %c0_86] : memref<4x36xf32, #tpu.memory_space<vmem>>, vector<4x36xf32>
    %c0_87 = arith.constant 0 : index
    %c0_88 = arith.constant 0 : index
    %108 = vector.load %arg12[%c0_87, %c0_88] : memref<36x256xf32, #tpu.memory_space<vmem>>, vector<36x256xf32>
    %cst_89 = arith.constant dense<0.000000e+00> : vector<4x256xf32>
    %109 = tpu.matmul %107, %108, %cst_89 {dimension_numbers = #tpu.dot_dimension_numbers<[1], [0], [0], [1], [0, 0, 1, 1], [], []>} : vector<4x36xf32>, vector<36x256xf32>, vector<4x256xf32> -> vector<4x256xf32>
    %c0_90 = arith.constant 0 : index
    %c0_91 = arith.constant 0 : index
    %110 = vector.load %arg8[%c0_90, %c0_91] : memref<4x1xf32, #tpu.memory_space<vmem>>, vector<4x1xf32>
    %111 = vector.broadcast %110 : vector<4x1xf32> to vector<4x256xf32>
    %112 = arith.mulf %109, %111 : vector<4x256xf32>
    %c0_92 = arith.constant 0 : index
    %c0_93 = arith.constant 0 : index
    %113 = vector.load %arg9[%c0_92, %c0_93] : memref<4x1xf32, #tpu.memory_space<vmem>>, vector<4x1xf32>
    %114 = vector.broadcast %113 : vector<4x1xf32> to vector<4x256xf32>
    %115 = arith.addf %112, %114 : vector<4x256xf32>
    %cst_94 = arith.constant 0.000000e+00 : f32
    %116 = vector.broadcast %cst_94 : f32 to vector<4x256xf32>
    %117 = arith.maximumf %115, %116 : vector<4x256xf32>
    %118 = arith.addf %117, %26 : vector<4x256xf32>
    %c0_95 = arith.constant 0 : index
    %c0_96 = arith.constant 0 : index
    %c0_97 = arith.constant 0 : index
    %119 = vector.load %arg10[%c0_95, %c0_96, %c0_97] : memref<1x4x256xf32, #tpu.memory_space<vmem>>, vector<1x4x256xf32>
    %120 = vector.shape_cast %119 : vector<1x4x256xf32> to vector<4x256xf32>
    %121 = vector.shape_cast %118 : vector<4x256xf32> to vector<1x4x256xf32>
    tpu.vector_store %arg10[%c0_95, %c0_96, %c0_97], %121 {strides = array<i32>} : memref<1x4x256xf32, #tpu.memory_space<vmem>>, vector<1x4x256xf32>,
    return
  }
  func.func @transform_0(%arg0: i32) -> (i32, i32, i32) {
    %c0_i32 = arith.constant 0 : i32
    %c0_i32_0 = arith.constant 0 : i32
    %c0_i32_1 = arith.constant 0 : i32
    return %arg0, %c0_i32, %c0_i32_0 : i32, i32, i32
  }
  func.func @transform_1(%arg0: i32) -> (i32, i32) {
    %c0_i32 = arith.constant 0 : i32
    %c0_i32_0 = arith.constant 0 : i32
    %c0_i32_1 = arith.constant 0 : i32
    return %c0_i32, %c0_i32_0 : i32, i32
  }
  func.func @transform_2(%arg0: i32) -> (i32, i32) {
    %c0_i32 = arith.constant 0 : i32
    %c0_i32_0 = arith.constant 0 : i32
    %c0_i32_1 = arith.constant 0 : i32
    return %c0_i32, %c0_i32_0 : i32, i32
  }
  func.func @transform_3(%arg0: i32) -> (i32, i32) {
    %c0_i32 = arith.constant 0 : i32
    %c0_i32_0 = arith.constant 0 : i32
    %c0_i32_1 = arith.constant 0 : i32
    return %c0_i32, %c0_i32_0 : i32, i32
  }
  func.func @transform_4(%arg0: i32) -> (i32, i32) {
    %c0_i32 = arith.constant 0 : i32
    %c0_i32_0 = arith.constant 0 : i32
    %c0_i32_1 = arith.constant 0 : i32
    return %c0_i32, %c0_i32_0 : i32, i32
  }
  func.func @transform_5(%arg0: i32) -> (i32, i32) {
    %c0_i32 = arith.constant 0 : i32
    %c0_i32_0 = arith.constant 0 : i32
    %c0_i32_1 = arith.constant 0 : i32
    return %c0_i32, %c0_i32_0 : i32, i32
  }
  func.func @transform_6(%arg0: i32) -> (i32, i32) {
    %c0_i32 = arith.constant 0 : i32
    %c0_i32_0 = arith.constant 0 : i32
    %c0_i32_1 = arith.constant 0 : i32
    return %c0_i32, %c0_i32_0 : i32, i32
  }
  func.func @transform_7(%arg0: i32) -> (i32, i32) {
    %c0_i32 = arith.constant 0 : i32
    %c0_i32_0 = arith.constant 0 : i32
    %c0_i32_1 = arith.constant 0 : i32
    return %c0_i32, %c0_i32_0 : i32, i32
  }
  func.func @transform_8(%arg0: i32) -> (i32, i32) {
    %c0_i32 = arith.constant 0 : i32
    %c0_i32_0 = arith.constant 0 : i32
    %c0_i32_1 = arith.constant 0 : i32
    return %c0_i32, %c0_i32_0 : i32, i32
  }
  func.func @transform_9(%arg0: i32) -> (i32, i32, i32) {
    %c0_i32 = arith.constant 0 : i32
    %c0_i32_0 = arith.constant 0 : i32
    %c0_i32_1 = arith.constant 0 : i32
    return %arg0, %c0_i32, %c0_i32_0 : i32, i32, i32
  }
}

</mosaic_0001>

<llo_original>
// kernel: tpu_custom_call.1
$region0: #{tpu_custom_call.1}
  #allocation0 [shape = 'u32[]', space=smem, size = 0x4, offset = 0x4, fixed_abs, tag = 'smem constant byte address 0x4 - core index']
  #allocation1 [shape = 'u32[144,128]{1,0:T(1,128)}', space=vmem, size = 0x12000, scoped, tag = 'internal scratch']
  #allocation2 [shape = 'f32[4,290]{1,0:T(4,128)}', space=vmem, size = 0x1800, scoped, tag = 'scratch operand']
  #allocation3 [shape = 'f32[36,256]{1,0:T(8,128)}', space=vmem, size = 0xa000, scoped, tag = 'scratch operand']
  %s0 = inlined_call_operand.vmem [shape: f32[2,4,256], index: 0, kind: input, shape index: {}]
  %s1 = inlined_call_operand.vmem [shape: f32[4,36], index: 1, kind: input, shape index: {}]
  %s2 = inlined_call_operand.vmem [shape: f32[4,1], index: 2, kind: input, shape index: {}]
  %s3 = inlined_call_operand.vmem [shape: f32[4,1], index: 3, kind: input, shape index: {}]
  %s4 = inlined_call_operand.vmem [shape: f32[4,4], index: 4, kind: input, shape index: {}]
  %s5 = inlined_call_operand.vmem [shape: f32[4,1], index: 5, kind: input, shape index: {}]
  %s6 = inlined_call_operand.vmem [shape: f32[4,36], index: 6, kind: input, shape index: {}]
  %s7 = inlined_call_operand.vmem [shape: f32[4,1], index: 7, kind: input, shape index: {}]
  %s8 = inlined_call_operand.vmem [shape: f32[4,1], index: 8, kind: input, shape index: {}]
  %s9 = inlined_call_operand.hbm [shape: f32[2,4,256], index: 9, kind: output, shape index: {}]
  %s10 = sld [smem:[#allocation0]]
  $region69: #{tpu_custom_call.1} parent=0
    _
  %s12 = ssub.s32 1, %s10
  %s13 = scalar_select 0, %s12, %s10
  $region1: #{tpu_custom_call.1} parent=0
    #allocation4 [shape = 'u8[8192]{0}', space=vmem, size = 0x2000, scoped, tag = 'output window, operand 0']
    #allocation5 [shape = 's32[2]{0}', space=sflag, size = 0x8, scoped, tag = 'scoped memory for tpu_custom_call.1']
    %14 = vsyncpa [#allocation5], 0
    %s15 = scalar_lea.sflag [#allocation5], 1
    %16 = vsyncpa %s15, 0
    loop: start=0, step=1, limit=4
    $region2: #{tpu_custom_call.1} parent=1 // loop_pre_header
      _
    $region3: #{tpu_custom_call.1} parent=1 // loop_header
      %s18 = sphi 0, %s22
      %p19 = scmp.ge.s32.totalorder %s18, 4
      %s28 = sphi 0, %s30
      %s31 = sphi 0, %s28
      %s32 = sphi 0, %s31
      %s48 = sphi 0, %s32
      %s52 = sphi 0, %s52
      %s54 = sphi 0, %s52
      %s55 = sphi 0, %s54
      %s69 = sphi 0, %s55
      %s73 = sphi 0, %s73
      %s75 = sphi 0, %s73
      %s76 = sphi 0, %s75
      %s90 = sphi 0, %s76
      %s94 = sphi 0, %s94
      %s96 = sphi 0, %s94
      %s97 = sphi 0, %s96
      %s111 = sphi 0, %s97
      %s115 = sphi 0, %s115
      %s117 = sphi 0, %s115
      %s118 = sphi 0, %s117
      %s132 = sphi 0, %s118
      %s136 = sphi 0, %s136
      %s138 = sphi 0, %s136
      %s139 = sphi 0, %s138
      %s153 = sphi 0, %s139
      %s157 = sphi 0, %s157
      %s159 = sphi 0, %s157
      %s160 = sphi 0, %s159
      %s174 = sphi 0, %s160
      %s178 = sphi 0, %s178
      %s180 = sphi 0, %s178
      %s181 = sphi 0, %s180
      %s195 = sphi 0, %s181
      %s199 = sphi 0, %s199
      %s201 = sphi 0, %s199
      %s202 = sphi 0, %s201
      %s216 = sphi 0, %s202
      %s222 = sphi 0, %s224
      %s225 = sphi 0, %s222
      %s226 = sphi 0, %s225
      %s242 = sphi 0, %s226
    $region4: #{tpu_custom_call.1} parent=1 // loop_header_branch
      %21 = sbr.rel (%p19) target = $region8
    $region5: #{tpu_custom_call.1} parent=1 // loop_body
      %s23 = ssub.s32 %s18, 1
      %s24 = ssub.s32 %s18, 2
      %s25 = sadd.s32 %s18, 1
      %s26 = ssub.s32 %s18, %s25
      %p27 = scmp.eq.s32.totalorder %s26, 0
      %s29 = sadd.s32 %s28, 1
      %s30 = scalar_select %p27, %s28, %s29
      %p33 = pneg %p27
      %p34 = scmp.eq.s32.totalorder %s18, 1
      %p35 = por %p33, %p34
      %p36 = scmp.ne.s32.totalorder %s28, %s31
      %p37 = scmp.eq.s32.totalorder %s18, 0
      %p38 = por %p36, %p37
      %p39 = scmp.ne.s32.totalorder %s28, %s31
      %p40 = scmp.eq.s32.totalorder %s23, 1
      %p41 = por %p39, %p40
      %p42 = scmp.ne.s32.totalorder %s31, %s32
      %p43 = scmp.eq.s32.totalorder %s23, 0
      %p44 = por %p42, %p43
      %p45 = scmp.ne.s32.totalorder %s31, %s32
      %p46 = scmp.eq.s32.totalorder %s24, 1
      %p47 = por %p45, %p46
      %p49 = scmp.ne.s32.totalorder %s32, %s48
      %p50 = scmp.eq.s32.totalorder %s24, 0
      %p51 = por %p49, %p50
      %s53 = sadd.s32 %s52, 1
      %p56 = scmp.eq.s32.totalorder %s18, 1
      %p57 = scmp.ne.s32.totalorder %s52, %s54
      %p58 = scmp.eq.s32.totalorder %s18, 0
      %p59 = por %p57, %p58
      %p60 = scmp.ne.s32.totalorder %s52, %s54
      %p61 = scmp.eq.s32.totalorder %s23, 1
      %p62 = por %p60, %p61
      %p63 = scmp.ne.s32.totalorder %s54, %s55
      %p64 = scmp.eq.s32.totalorder %s23, 0
      %p65 = por %p63, %p64
      %p66 = scmp.ne.s32.totalorder %s54, %s55
      %p67 = scmp.eq.s32.totalorder %s24, 1
      %p68 = por %p66, %p67
      %p70 = scmp.ne.s32.totalorder %s55, %s69
      %p71 = scmp.eq.s32.totalorder %s24, 0
      %p72 = por %p70, %p71
      %s74 = sadd.s32 %s73, 1
      %p77 = scmp.eq.s32.totalorder %s18, 1
      %p78 = scmp.ne.s32.totalorder %s73, %s75
      %p79 = scmp.eq.s32.totalorder %s18, 0
      %p80 = por %p78, %p79
      %p81 = scmp.ne.s32.totalorder %s73, %s75
      %p82 = scmp.eq.s32.totalorder %s23, 1
      %p83 = por %p81, %p82
      %p84 = scmp.ne.s32.totalorder %s75, %s76
      %p85 = scmp.eq.s32.totalorder %s23, 0
      %p86 = por %p84, %p85
      %p87 = scmp.ne.s32.totalorder %s75, %s76
      %p88 = scmp.eq.s32.totalorder %s24, 1
      %p89 = por %p87, %p88
      %p91 = scmp.ne.s32.totalorder %s76, %s90
      %p92 = scmp.eq.s32.totalorder %s24, 0
      %p93 = por %p91, %p92
      %s95 = sadd.s32 %s94, 1
      %p98 = scmp.eq.s32.totalorder %s18, 1
      %p99 = scmp.ne.s32.totalorder %s94, %s96
      %p100 = scmp.eq.s32.totalorder %s18, 0
      %p101 = por %p99, %p100
      %p102 = scmp.ne.s32.totalorder %s94, %s96
      %p103 = scmp.eq.s32.totalorder %s23, 1
      %p104 = por %p102, %p103
      %p105 = scmp.ne.s32.totalorder %s96, %s97
      %p106 = scmp.eq.s32.totalorder %s23, 0
      %p107 = por %p105, %p106
      %p108 = scmp.ne.s32.totalorder %s96, %s97
      %p109 = scmp.eq.s32.totalorder %s24, 1
      %p110 = por %p108, %p109
      %p112 = scmp.ne.s32.totalorder %s97, %s111
      %p113 = scmp.eq.s32.totalorder %s24, 0
      %p114 = por %p112, %p113
      %s116 = sadd.s32 %s115, 1
      %p119 = scmp.eq.s32.totalorder %s18, 1
      %p120 = scmp.ne.s32.totalorder %s115, %s117
      %p121 = scmp.eq.s32.totalorder %s18, 0
      %p122 = por %p120, %p121
      %p123 = scmp.ne.s32.totalorder %s115, %s117
      %p124 = scmp.eq.s32.totalorder %s23, 1
      %p125 = por %p123, %p124
      %p126 = scmp.ne.s32.totalorder %s117, %s118
      %p127 = scmp.eq.s32.totalorder %s23, 0
      %p128 = por %p126, %p127
      %p129 = scmp.ne.s32.totalorder %s117, %s118
      %p130 = scmp.eq.s32.totalorder %s24, 1
      %p131 = por %p129, %p130
      %p133 = scmp.ne.s32.totalorder %s118, %s132
      %p134 = scmp.eq.s32.totalorder %s24, 0
      %p135 = por %p133, %p134
      %s137 = sadd.s32 %s136, 1
      %p140 = scmp.eq.s32.totalorder %s18, 1
      %p141 = scmp.ne.s32.totalorder %s136, %s138
      %p142 = scmp.eq.s32.totalorder %s18, 0
      %p143 = por %p141, %p142
      %p144 = scmp.ne.s32.totalorder %s136, %s138
      %p145 = scmp.eq.s32.totalorder %s23, 1
      %p146 = por %p144, %p145
      %p147 = scmp.ne.s32.totalorder %s138, %s139
      %p148 = scmp.eq.s32.totalorder %s23, 0
      %p149 = por %p147, %p148
      %p150 = scmp.ne.s32.totalorder %s138, %s139
      %p151 = scmp.eq.s32.totalorder %s24, 1
      %p152 = por %p150, %p151
      %p154 = scmp.ne.s32.totalorder %s139, %s153
      %p155 = scmp.eq.s32.totalorder %s24, 0
      %p156 = por %p154, %p155
      %s158 = sadd.s32 %s157, 1
      %p161 = scmp.eq.s32.totalorder %s18, 1
      %p162 = scmp.ne.s32.totalorder %s157, %s159
      %p163 = scmp.eq.s32.totalorder %s18, 0
      %p164 = por %p162, %p163
      %p165 = scmp.ne.s32.totalorder %s157, %s159
      %p166 = scmp.eq.s32.totalorder %s23, 1
      %p167 = por %p165, %p166
      %p168 = scmp.ne.s32.totalorder %s159, %s160
      %p169 = scmp.eq.s32.totalorder %s23, 0
      %p170 = por %p168, %p169
      %p171 = scmp.ne.s32.totalorder %s159, %s160
      %p172 = scmp.eq.s32.totalorder %s24, 1
      %p173 = por %p171, %p172
      %p175 = scmp.ne.s32.totalorder %s160, %s174
      %p176 = scmp.eq.s32.totalorder %s24, 0
      %p177 = por %p175, %p176
      %s179 = sadd.s32 %s178, 1
      %p182 = scmp.eq.s32.totalorder %s18, 1
      %p183 = scmp.ne.s32.totalorder %s178, %s180
      %p184 = scmp.eq.s32.totalorder %s18, 0
      %p185 = por %p183, %p184
      %p186 = scmp.ne.s32.totalorder %s178, %s180
      %p187 = scmp.eq.s32.totalorder %s23, 1
      %p188 = por %p186, %p187
      %p189 = scmp.ne.s32.totalorder %s180, %s181
      %p190 = scmp.eq.s32.totalorder %s23, 0
      %p191 = por %p189, %p190
      %p192 = scmp.ne.s32.totalorder %s180, %s181
      %p193 = scmp.eq.s32.totalorder %s24, 1
      %p194 = por %p192, %p193
      %p196 = scmp.ne.s32.totalorder %s181, %s195
      %p197 = scmp.eq.s32.totalorder %s24, 0
      %p198 = por %p196, %p197
      %s200 = sadd.s32 %s199, 1
      %p203 = scmp.eq.s32.totalorder %s18, 1
      %p204 = scmp.ne.s32.totalorder %s199, %s201
      %p205 = scmp.eq.s32.totalorder %s18, 0
      %p206 = por %p204, %p205
      %p207 = scmp.ne.s32.totalorder %s199, %s201
      %p208 = scmp.eq.s32.totalorder %s23, 1
      %p209 = por %p207, %p208
      %p210 = scmp.ne.s32.totalorder %s201, %s202
      %p211 = scmp.eq.s32.totalorder %s23, 0
      %p212 = por %p210, %p211
      %p213 = scmp.ne.s32.totalorder %s201, %s202
      %p214 = scmp.eq.s32.totalorder %s24, 1
      %p215 = por %p213, %p214
      %p217 = scmp.ne.s32.totalorder %s202, %s216
      %p218 = scmp.eq.s32.totalorder %s24, 0
      %p219 = por %p217, %p218
      %s220 = ssub.s32 %s18, %s25
      %p221 = scmp.eq.s32.totalorder %s220, 0
      %s223 = sadd.s32 %s222, 1
      %s224 = scalar_select %p221, %s222, %s223
      %p227 = pneg %p221
      %p228 = scmp.eq.s32.totalorder %s18, 1
      %p229 = por %p227, %p228
      %p230 = scmp.ne.s32.totalorder %s222, %s225
      %p231 = scmp.eq.s32.totalorder %s18, 0
      %p232 = por %p230, %p231
      %p233 = scmp.ne.s32.totalorder %s222, %s225
      %p234 = scmp.eq.s32.totalorder %s23, 1
      %p235 = por %p233, %p234
      %p236 = scmp.ne.s32.totalorder %s225, %s226
      %p237 = scmp.eq.s32.totalorder %s23, 0
      %p238 = por %p236, %p237
      %p239 = scmp.ne.s32.totalorder %s225, %s226
      %p240 = scmp.eq.s32.totalorder %s24, 1
      %p241 = por %p239, %p240
      %p243 = scmp.ne.s32.totalorder %s226, %s242
      %p244 = scmp.eq.s32.totalorder %s24, 0
      %p245 = por %p243, %p244
      %p246 = scmp.le.s32.totalorder 1, %s18
      %p247 = scmp.lt.s32.totalorder %s18, 3
      %p248 = pnand %p246, %p247
      %p249 = pneg %p248
      // Predicated region
      $region9: #{tpu_custom_call.1} parent=5 // pred_check
        _
      $region10: #{tpu_custom_call.1} parent=5 // pred_check_branch
        %251 = sbr.rel (%p248) target = $region12
      $region11: #{tpu_custom_call.1} parent=5 // pred_region
        %s252 = ssub.s32 %s18, 1
        // Predicated region
        $region13: #{tpu_custom_call.1} parent=11 // pred_check
          %p253 = pneg %p65
        $region14: #{tpu_custom_call.1} parent=11 // pred_check_branch
          %255 = sbr.rel (%p253) target = $region16
        $region15: #{tpu_custom_call.1} parent=11 // pred_region
          _
        $region16: #{tpu_custom_call.1} parent=11 // pred_fallthru
          _
        // Predicated region
        $region17: #{tpu_custom_call.1} parent=11 // pred_check
          %p256 = pneg %p86
        $region18: #{tpu_custom_call.1} parent=11 // pred_check_branch
          %258 = sbr.rel (%p256) target = $region20
        $region19: #{tpu_custom_call.1} parent=11 // pred_region
          _
        $region20: #{tpu_custom_call.1} parent=11 // pred_fallthru
          _
        // Predicated region
        $region21: #{tpu_custom_call.1} parent=11 // pred_check
          %p259 = pneg %p107
        $region22: #{tpu_custom_call.1} parent=11 // pred_check_branch
          %261 = sbr.rel (%p259) target = $region24
        $region23: #{tpu_custom_call.1} parent=11 // pred_region
          _
        $region24: #{tpu_custom_call.1} parent=11 // pred_fallthru
          _
        // Predicated region
        $region25: #{tpu_custom_call.1} parent=11 // pred_check
          %p262 = pneg %p128
        $region26: #{tpu_custom_call.1} parent=11 // pred_check_branch
          %264 = sbr.rel (%p262) target = $region28
        $region27: #{tpu_custom_call.1} parent=11 // pred_region
          _
        $region28: #{tpu_custom_call.1} parent=11 // pred_fallthru
          _
        // Predicated region
        $region29: #{tpu_custom_call.1} parent=11 // pred_check
          %p265 = pneg %p149
        $region30: #{tpu_custom_call.1} parent=11 // pred_check_branch
          %267 = sbr.rel (%p265) target = $region32
        $region31: #{tpu_custom_call.1} parent=11 // pred_region
          _
        $region32: #{tpu_custom_call.1} parent=11 // pred_fallthru
          _
        // Predicated region
        $region33: #{tpu_custom_call.1} parent=11 // pred_check
          %p268 = pneg %p170
        $region34: #{tpu_custom_call.1} parent=11 // pred_check_branch
          %270 = sbr.rel (%p268) target = $region36
        $region35: #{tpu_custom_call.1} parent=11 // pred_region
          _
        $region36: #{tpu_custom_call.1} parent=11 // pred_fallthru
          _
        // Predicated region
        $region37: #{tpu_custom_call.1} parent=11 // pred_check
          %p271 = pneg %p191
        $region38: #{tpu_custom_call.1} parent=11 // pred_check_branch
          %273 = sbr.rel (%p271) target = $region40
        $region39: #{tpu_custom_call.1} parent=11 // pred_region
          _
        $region40: #{tpu_custom_call.1} parent=11 // pred_fallthru
          _
        // Predicated region
        $region41: #{tpu_custom_call.1} parent=11 // pred_check
          %p274 = pneg %p212
        $region42: #{tpu_custom_call.1} parent=11 // pred_check_branch
          %276 = sbr.rel (%p274) target = $region44
        $region43: #{tpu_custom_call.1} parent=11 // pred_region
          _
        $region44: #{tpu_custom_call.1} parent=11 // pred_fallthru
          _
      $region12: #{tpu_custom_call.1} parent=5 // pred_fallthru
        _
      %p277 = scmp.lt.s32.totalorder %s18, 2
      // Predicated region
      $region45: #{tpu_custom_call.1} parent=5 // pred_check
        %p278 = pneg %p277
      $region46: #{tpu_custom_call.1} parent=5 // pred_check_branch
        %280 = sbr.rel (%p278) target = $region48
      $region47: #{tpu_custom_call.1} parent=5 // pred_region
        // Predicated region
        $region49: #{tpu_custom_call.1} parent=47 // pred_check
          %p281 = pneg %p38
        $region50: #{tpu_custom_call.1} parent=47 // pred_check_branch
          %283 = sbr.rel (%p281) target = $region52
        $region51: #{tpu_custom_call.1} parent=47 // pred_region
          %p284 = scmp.lt.s32.totalorder %s18, 1
          %s285 = scalar_select %p284, %s18, 1
          %s286 = smul.addr %s285, 2
          %s287 = smul.addr %s286, 4
          %s288 = scalar_lea.vmem %s0, %s287
        $region52: #{tpu_custom_call.1} parent=47 // pred_fallthru
          _
      $region48: #{tpu_custom_call.1} parent=5 // pred_fallthru
        _
      %p289 = scmp.le.s32.totalorder 1, %s18
      %p290 = scmp.lt.s32.totalorder %s18, 3
      %p291 = pnand %p289, %p290
      %p292 = pneg %p291
      // Predicated region
      $region53: #{tpu_custom_call.1} parent=5 // pred_check
        _
      $region54: #{tpu_custom_call.1} parent=5 // pred_check_branch
        %294 = sbr.rel (%p291) target = $region56
      $region55: #{tpu_custom_call.1} parent=5 // pred_region
        %s295 = ssub.s32 %s18, 1
        %p296 = scmp.lt.s32.totalorder %s23, 1
        %s297 = scalar_select %p296, %s23, 1
        %s298 = smul.addr %s297, 2
        %s299 = smul.addr %s298, 4
        %s300 = scalar_lea.vmem %s0, %s299
        %p301 = pneg %p44
        %p302 = pneg %p41
        %p303 = pneg %p65
        %p304 = pneg %p62
        %p305 = pneg %p86
        %p306 = pneg %p83
        %p307 = pneg %p107
        %p308 = pneg %p104
        %p309 = pneg %p128
        %p310 = pneg %p125
        %p311 = pneg %p149
        %p312 = pneg %p146
        %p313 = pneg %p170
        %p314 = pneg %p167
        %p315 = pneg %p191
        %p316 = pneg %p188
        %p317 = pneg %p212
        %p318 = pneg %p209
        %p319 = pneg %p238
        %p320 = pneg %p235
        %s321 = sand.u32 %s225, 1
        %s322 = scalar_lea.sflag [#allocation5], %s321
        %s323 = sand.u32 %s225, 1
        %s324 = smul.addr %s323, 8
        %s325 = scalar_lea.vmem [#allocation4], %s324
        %p326 = scmp.lt.s32.totalorder %s23, 1
        %s327 = scalar_select %p326, %s23, 1
        %s328 = smul.addr %s327, 2
        %s329 = smul.addr %s328, 4
        %s330 = scalar_lea.vmem %s0, %s329
        %v331 = vlaneseq
        %v332 = vand.u32 %v331, 127
        %v333 = vadd.s32 %v332, 128
        %vm334 = vcmp.lt.s32.totalorder %v332, 0
        %v335 = vsub.s32 0, %v332
        %v336 = vsel %vm334, %v335, %v332
        %v337 = vshrl.u32 %v336, 4
        %v338 = vand.u32 %v336, 15
        %v339 = vsub.s32 0, %v338
        %v340 = vsel %vm334, %v339, %v338
        %vm341 = vcmp.lt.s32.totalorder %v333, 0
        %v342 = vsub.s32 0, %v333
        %v343 = vsel %vm341, %v342, %v333
        %v344 = vshrl.u32 %v343, 4
        %v345 = vand.u32 %v343, 15
        %v346 = vsub.s32 0, %v345
        %v347 = vsel %vm341, %v346, %v345
        %vm348 = vcmp.ne.s32.totalorder %v340, 0
        %vm349 = vcmp.ne.s32.totalorder %v347, 0
        %vm350 = vcmp.lt.s32.totalorder %v340, 0
        %vm351 = vcmp.lt.s32.totalorder %v347, 0
        %vm352 = vmand %vm350, %vm348
        %vm353 = vmand %vm351, %vm349
        %v354 = vadd.s32 %v340, 16
        %v355 = vadd.s32 %v347, 16
        %v356 = vsel %vm352, %v354, %v340
        %v357 = vsel %vm353, %v355, %v347
        %vm358 = vcmp.ne.s32.totalorder %v356, 0
        %vm359 = vcmp.ne.s32.totalorder %v357, 0
        %v360 = vsel %vm358, 1, 0
        %v361 = vsel %vm359, 1, 0
        %v362 = vcvt.s32.f32 %v360
        %v363 = vcvt.s32.f32 %v361
        %vm364 = vcmp.ne.s32.totalorder %v356, 15
        %vm365 = vcmp.ne.s32.totalorder %v357, 15
        %v366 = vsel %vm364, 1, 0
        %v367 = vsel %vm365, 1, 0
        %v368 = vcvt.s32.f32 %v366
        %v369 = vcvt.s32.f32 %v367
        %v370 = vld [vmem:[%s330] sm:$0xff]
        %371 = vst [vmem:[#allocation2] sm:$0xff] 0.0
        %vm372 = vcmask 273408
        %373 = vst.msk [vmem:[#allocation2 + $0x8] sm:$0xf] %vm372, 0.0
        %375 = vrot.lane.b32.xlu0 %v370, 17
        %v376 = vpop.permute.xlu0 %375
        %v377 = vrot.slane %v376, 4
        %vm378 = vcmask 138240
        %v379 = vsel %vm378, %v377, %v376
        %vm382 = vcmask 1043592
        %vm383 = vcmask 1047556
        %vm384 = vmor %vm383, %vm382
        %385 = vst.msk [vmem:[#allocation2] sm:$0xff] %vm384, %v379
        %vm386 = vcmask 134144
        %387 = vst.msk [vmem:[#allocation2 + $0x8] sm:$0xf] %vm386, %v377
        %v388 = vld [vmem:[#allocation2] sm:$0xff]
        %v391 = vcombine.low %v362, %v363
        %v393 = vmul.f32 %v388, %v391
        %v395 = vcombine.high %v393, %v393
        %397 = vst [vmem:[#allocation3] sm:$0xf] %v393
        %398 = vst [vmem:[#allocation3 + $0x8] sm:$0xf] %v395
        %v399 = vld [vmem:[#allocation2] sm:$0xff]
        %v400 = vld [vmem:[#allocation2 + $0x8] sm:$0xf]
        %v403 = vcombine.low %v399, %v399
        %v404 = vcombine.low %v400, %v400
        %405 = vrot.lane.b32.xlu0 %v403, 127
        %v406 = vpop.permute.xlu0 %405
        %407 = vrot.lane.b32.xlu0 %v399, 127
        %v408 = vpop.permute.xlu0 %407
        %409 = vrot.lane.b32.xlu0 %v404, 127
        %v410 = vpop.permute.xlu0 %409
        %vm411 = vcmask 1039360
        %v412 = vsel %vm411, %v406, %v408
        %v413 = vsel %vm411, %v408, %v410
        %416 = vst [vmem:[#allocation3] sm:$0xf0] %v412
        %417 = vst [vmem:[#allocation3 + $0x8] sm:$0xf0] %v413
        %v418 = vld [vmem:[#allocation2] sm:$0xff]
        %v419 = vld [vmem:[#allocation2 + $0x8] sm:$0xf]
        %v422 = vcombine.low %v368, %v369
        %423 = vrot.lane.b32.xlu0 %v422, 2
        %v424 = vpop.permute.xlu0 %423
        %v425 = vrot.slane %v424, 4
        %vm426 = vcmask 15360
        %v427 = vsel %vm426, %v425, %v424
        %v430 = vmul.f32 %v418, %v427
        %v431 = vmul.f32 %v419, %v425
        %v434 = vcombine.high %v430, %v430
        %435 = vrot.lane.b32.xlu0 %v430, 126
        %v436 = vpop.permute.xlu0 %435
        %437 = vrot.lane.b32.xlu0 %v434, 126
        %v438 = vpop.permute.xlu0 %437
        %439 = vrot.lane.b32.xlu0 %v431, 126
        %v440 = vpop.permute.xlu0 %439
        %vm441 = vcmask 1031168
        %v442 = vsel %vm441, %v436, %v438
        %v443 = vsel %vm441, %v438, %v440
        %446 = vst [vmem:[#allocation3 + $0x10] sm:$0xf] %v442
        %447 = vst [vmem:[#allocation3 + $0x18] sm:$0xf] %v443
        %v448 = vld [vmem:[#allocation2] sm:$0xff]
        %v449 = vld [vmem:[#allocation2 + $0x8] sm:$0xf]
        %450 = vrot.lane.b32.xlu0 %v391, 16
        %v451 = vpop.permute.xlu0 %450
        %v452 = vrot.slane %v451, 4
        %vm453 = vcmask 130048
        %v454 = vsel %vm453, %v452, %v451
        %v457 = vmul.f32 %v448, %v454
        %v458 = vmul.f32 %v449, %v452
        %v461 = vcombine.low %v457, %v457
        %v462 = vcombine.low %v458, %v458
        %463 = vrot.lane.b32.xlu0 %v461, 112
        %v464 = vpop.permute.xlu0 %463
        %465 = vrot.lane.b32.xlu0 %v457, 112
        %v466 = vpop.permute.xlu0 %465
        %467 = vrot.lane.b32.xlu0 %v462, 112
        %v468 = vpop.permute.xlu0 %467
        %vm469 = vcmask 916480
        %v470 = vsel %vm469, %v464, %v466
        %v471 = vsel %vm469, %v466, %v468
        %474 = vst [vmem:[#allocation3 + $0x10] sm:$0xf0] %v470
        %475 = vst [vmem:[#allocation3 + $0x18] sm:$0xf0] %v471
        %v476 = vld [vmem:[#allocation2] sm:$0xff]
        %v477 = vld [vmem:[#allocation2 + $0x8] sm:$0xf]
        %v480 = vcombine.high %v476, %v476
        %481 = vrot.lane.b32.xlu0 %v476, 111
        %v482 = vpop.permute.xlu0 %481
        %483 = vrot.lane.b32.xlu0 %v480, 111
        %v484 = vpop.permute.xlu0 %483
        %485 = vrot.lane.b32.xlu0 %v477, 111
        %v486 = vpop.permute.xlu0 %485
        %vm487 = vcmask 908288
        %v488 = vsel %vm487, %v482, %v484
        %v489 = vsel %vm487, %v484, %v486
        %492 = vst [vmem:[#allocation3 + $0x20] sm:$0xf] %v488
        %493 = vst [vmem:[#allocation3 + $0x28] sm:$0xf] %v489
        %v494 = vld [vmem:[#allocation2] sm:$0xff]
        %v495 = vld [vmem:[#allocation2 + $0x8] sm:$0xf]
        %496 = vrot.lane.b32.xlu0 %v422, 18
        %v497 = vpop.permute.xlu0 %496
        %v498 = vrot.slane %v497, 4
        %vm499 = vcmask 146432
        %v500 = vsel %vm499, %v498, %v497
        %v503 = vmul.f32 %v494, %v500
        %v504 = vmul.f32 %v495, %v498
        %v507 = vcombine.low %v503, %v503
        %v508 = vcombine.low %v504, %v504
        %509 = vrot.lane.b32.xlu0 %v507, 110
        %v510 = vpop.permute.xlu0 %509
        %511 = vrot.lane.b32.xlu0 %v503, 110
        %v512 = vpop.permute.xlu0 %511
        %513 = vrot.lane.b32.xlu0 %v508, 110
        %v514 = vpop.permute.xlu0 %513
        %vm515 = vcmask 900096
        %v516 = vsel %vm515, %v510, %v512
        %v517 = vsel %vm515, %v512, %v514
        %520 = vst [vmem:[#allocation3 + $0x20] sm:$0xf0] %v516
        %521 = vst [vmem:[#allocation3 + $0x28] sm:$0xf0] %v517
        %v522 = vld [vmem:[#allocation2] sm:$0xff]
        %v523 = vld [vmem:[#allocation2 + $0x8] sm:$0xf]
        %524 = vrot.lane.b32.xlu0 %v391, 32
        %v525 = vpop.permute.xlu0 %524
        %v526 = vrot.slane %v525, 4
        %vm527 = vcmask 261120
        %v528 = vsel %vm527, %v526, %v525
        %v531 = vmul.f32 %v522, %v528
        %v532 = vmul.f32 %v523, %v526
        %v535 = vcombine.high %v531, %v531
        %536 = vrot.lane.b32.xlu0 %v531, 96
        %v537 = vpop.permute.xlu0 %536
        %538 = vrot.lane.b32.xlu0 %v535, 96
        %v539 = vpop.permute.xlu0 %538
        %540 = vrot.lane.b32.xlu0 %v532, 96
        %v541 = vpop.permute.xlu0 %540
        %vm542 = vcmask 785408
        %v543 = vsel %vm542, %v537, %v539
        %v544 = vsel %vm542, %v539, %v541
        %547 = vst [vmem:[#allocation3 + $0x30] sm:$0xf] %v543
        %548 = vst [vmem:[#allocation3 + $0x38] sm:$0xf] %v544
        %v549 = vld [vmem:[#allocation2] sm:$0xff]
        %v550 = vld [vmem:[#allocation2 + $0x8] sm:$0xf]
        %v553 = vcombine.low %v549, %v549
        %v554 = vcombine.low %v550, %v550
        %555 = vrot.lane.b32.xlu0 %v553, 95
        %v556 = vpop.permute.xlu0 %555
        %557 = vrot.lane.b32.xlu0 %v549, 95
        %v558 = vpop.permute.xlu0 %557
        %559 = vrot.lane.b32.xlu0 %v554, 95
        %v560 = vpop.permute.xlu0 %559
        %vm561 = vcmask 777216
        %v562 = vsel %vm561, %v556, %v558
        %v563 = vsel %vm561, %v558, %v560
        %566 = vst [vmem:[#allocation3 + $0x30] sm:$0xf0] %v562
        %567 = vst [vmem:[#allocation3 + $0x38] sm:$0xf0] %v563
        %v568 = vld [vmem:[#allocation2] sm:$0xff]
        %v569 = vld [vmem:[#allocation2 + $0x8] sm:$0xf]
        %570 = vrot.lane.b32.xlu0 %v422, 34
        %v571 = vpop.permute.xlu0 %570
        %v572 = vrot.slane %v571, 4
        %vm573 = vcmask 277504
        %v574 = vsel %vm573, %v572, %v571
        %v577 = vmul.f32 %v568, %v574
        %v578 = vmul.f32 %v569, %v572
        %v581 = vcombine.high %v577, %v577
        %582 = vrot.lane.b32.xlu0 %v577, 94
        %v583 = vpop.permute.xlu0 %582
        %584 = vrot.lane.b32.xlu0 %v581, 94
        %v585 = vpop.permute.xlu0 %584
        %586 = vrot.lane.b32.xlu0 %v578, 94
        %v587 = vpop.permute.xlu0 %586
        %vm588 = vcmask 769024
        %v589 = vsel %vm588, %v583, %v585
        %v590 = vsel %vm588, %v585, %v587
        %593 = vst [vmem:[#allocation3 + $0x40] sm:$0xf] %v589
        %594 = vst [vmem:[#allocation3 + $0x48] sm:$0xf] %v590
        %v595 = vld [vmem:[%s1] sm:$0xf]
        %v596 = vld [vmem:[#allocation3] sm:$0xff]
        %v597 = vld [vmem:[#allocation3 + $0x8] sm:$0xff]
        %v598 = vld [vmem:[#allocation3 + $0x10] sm:$0xff]
        %v599 = vld [vmem:[#allocation3 + $0x18] sm:$0xff]
        %v600 = vld [vmem:[#allocation3 + $0x20] sm:$0xff]
        %v601 = vld [vmem:[#allocation3 + $0x28] sm:$0xff]
        %v602 = vld [vmem:[#allocation3 + $0x30] sm:$0xff]
        %v603 = vld [vmem:[#allocation3 + $0x38] sm:$0xff]
        %v604 = vld [vmem:[#allocation3 + $0x40] sm:$0xf]
        %v605 = vld [vmem:[#allocation3 + $0x48] sm:$0xf]
        %vm606 = vcmask 293888
        %v608 = vsel %vm606, %v595, 0
        %vm610 = vcmask 1043456
        %v612 = vsel %vm610, %v604, 0
        %v615 = vsel %vm610, %v605, 0
        %617 = vmatprep.subr.mxu0 %v597
        %618 = vmatpush1.msra.mxu0 %v596
        %619 = vmatprep.subr.mxu0 %v599
        %620 = vmatpush1.msra.mxu0 %v598
        %621 = vmatprep.subr.mxu0 %v601
        %622 = vmatpush1.msra.mxu0 %v600
        %623 = vmatprep.subr.mxu0 %v603
        %624 = vmatpush1.msra.mxu0 %v602
        %625 = vmatprep.subr.mxu0 %v615
        %626 = vmatpush1.msra.mxu0 %v612
        %627 = vmatprep.subr.mxu0 0.0
        %628 = vmatpush1.msra.mxu0 0.0
        %629 = vmatprep.subr.mxu0 0.0
        %630 = vmatpush1.msra.mxu0 0.0
        %631 = vmatprep.subr.mxu0 0.0
        %632 = vmatpush1.msra.mxu0 0.0
        %633 = vmatprep.subr.mxu0 0.0
        %634 = vmatpush1.msra.mxu0 0.0
        %635 = vmatprep.subr.mxu0 0.0
        %636 = vmatpush1.msra.mxu0 0.0
        %637 = vmatprep.subr.mxu0 0.0
        %638 = vmatpush1.msra.mxu0 0.0
        %639 = vmatprep.subr.mxu0 0.0
        %640 = vmatpush1.msra.mxu0 0.0
        %641 = vmatprep.subr.mxu0 0.0
        %642 = vmatpush1.msra.mxu0 0.0
        %643 = vmatprep.subr.mxu0 0.0
        %644 = vmatpush1.msra.mxu0 0.0
        %645 = vmatprep.subr.mxu0 0.0
        %646 = vmatpush1.msra.mxu0 0.0
        %647 = vmatprep.subr.mxu0 0.0
        %648 = vmatpush1.msra.mxu0 0.0
        %649 = vmatprep.subr.mxu0 0.0
        %650 = vmatpush1.msra.mxu0 0.0
        %651 = vmatprep.subr.mxu0 0.0
        %652 = vmatpush1.msra.mxu0 0.0
        %653 = vmatprep.subr.mxu0 0.0
        %654 = vmatpush1.msra.mxu0 0.0
        %655 = vmatprep.subr.mxu0 0.0
        %656 = vmatpush1.msra.mxu0 0.0
        %657 = vmatprep.subr.mxu0 0.0
        %658 = vmatpush1.msra.mxu0 0.0
        %659 = vmatprep.subr.mxu0 0.0
        %660 = vmatpush1.msra.mxu0 0.0
        %661 = vmatprep.subr.mxu0 0.0
        %662 = vmatpush1.msra.mxu0 0.0
        %663 = vmatprep.subr.mxu0 0.0
        %664 = vmatpush1.msra.mxu0 0.0
        %665 = vmatprep.subr.mxu0 0.0
        %666 = vmatpush1.msra.mxu0 0.0
        %667 = vmatprep.subr.mxu0 0.0
        %668 = vmatpush1.msra.mxu0 0.0
        %669 = vmatprep.subr.mxu0 0.0
        %670 = vmatpush1.msra.mxu0 0.0
        %671 = vmatprep.subr.mxu0 0.0
        %672 = vmatpush1.msra.mxu0 0.0
        %673 = vmatprep.subr.mxu0 0.0
        %674 = vmatpush1.msra.mxu0 0.0
        %675 = vmatprep.subr.mxu0 0.0
        %676 = vmatpush1.msra.mxu0 0.0
        %677 = vmatprep.subr.mxu0 0.0
        %678 = vmatpush1.msra.mxu0 0.0
        %679 = vmatprep.subr.mxu0 0.0
        %680 = vmatpush1.msra.mxu0 0.0
        %681 = vmatprep.mubr.f32.mxu0 0.0
        %682 = vmatmul.mubr.f32.gmra.mrb[0].mxu0 %v608
        %v683 = vpop.f32.mrb[0].mxu0
        %v684 = vadd.f32 0.0, %v683
        %v685 = vpop.f32.mrb[0].mxu0
        %v686 = vadd.f32 0.0, %v685
        %687 = vdwg.mxu0
        %v688 = vld [vmem:[%s2] sm:$0xf]
        %690 = vset.pattern.permute.xlu0 0
        %691 = vperm.xlu0 %690, %v688
        %v692 = vpop.permute.xlu0 %691
        %v694 = vmul.f32 %v684, %v692
        %v695 = vmul.f32 %v686, %v692
        %v696 = vld [vmem:[%s3] sm:$0xf]
        %698 = vset.pattern.permute.xlu0 0
        %699 = vperm.xlu0 %698, %v696
        %v700 = vpop.permute.xlu0 %699
        %v702 = vadd.f32 %v694, %v700
        %v703 = vadd.f32 %v695, %v700
        %v704 = vmax.f32 %v702, 0.0
        %v705 = vmax.f32 %v703, 0.0
        %v706 = vld [vmem:[%s4] sm:$0xf]
        %v707 = vld [vmem:[%s5] sm:$0xf]
        %709 = vset.pattern.permute.xlu0 0
        %710 = vperm.xlu0 %709, %v707
        %v711 = vpop.permute.xlu0 %710
        %vm713 = vcmask 31744
        %v715 = vsel %vm713, %v706, 0
        %v718 = vsel %vm610, %v704, 0
        %v721 = vsel %vm610, %v705, 0
        %723 = vmatprep.subr.mxu0 %v721
        %724 = vmatpush1.msra.mxu0 %v718
        %725 = vmatprep.subr.mxu0 0.0
        %726 = vmatpush1.msra.mxu0 0.0
        %727 = vmatprep.subr.mxu0 0.0
        %728 = vmatpush1.msra.mxu0 0.0
        %729 = vmatprep.subr.mxu0 0.0
        %730 = vmatpush1.msra.mxu0 0.0
        %731 = vmatprep.subr.mxu0 0.0
        %732 = vmatpush1.msra.mxu0 0.0
        %733 = vmatprep.subr.mxu0 0.0
        %734 = vmatpush1.msra.mxu0 0.0
        %735 = vmatprep.subr.mxu0 0.0
        %736 = vmatpush1.msra.mxu0 0.0
        %737 = vmatprep.subr.mxu0 0.0
        %738 = vmatpush1.msra.mxu0 0.0
        %739 = vmatprep.subr.mxu0 0.0
        %740 = vmatpush1.msra.mxu0 0.0
        %741 = vmatprep.subr.mxu0 0.0
        %742 = vmatpush1.msra.mxu0 0.0
        %743 = vmatprep.subr.mxu0 0.0
        %744 = vmatpush1.msra.mxu0 0.0
        %745 = vmatprep.subr.mxu0 0.0
        %746 = vmatpush1.msra.mxu0 0.0
        %747 = vmatprep.subr.mxu0 0.0
        %748 = vmatpush1.msra.mxu0 0.0
        %749 = vmatprep.subr.mxu0 0.0
        %750 = vmatpush1.msra.mxu0 0.0
        %751 = vmatprep.subr.mxu0 0.0
        %752 = vmatpush1.msra.mxu0 0.0
        %753 = vmatprep.subr.mxu0 0.0
        %754 = vmatpush1.msra.mxu0 0.0
        %755 = vmatprep.subr.mxu0 0.0
        %756 = vmatpush1.msra.mxu0 0.0
        %757 = vmatprep.subr.mxu0 0.0
        %758 = vmatpush1.msra.mxu0 0.0
        %759 = vmatprep.subr.mxu0 0.0
        %760 = vmatpush1.msra.mxu0 0.0
        %761 = vmatprep.subr.mxu0 0.0
        %762 = vmatpush1.msra.mxu0 0.0
        %763 = vmatprep.subr.mxu0 0.0
        %764 = vmatpush1.msra.mxu0 0.0
        %765 = vmatprep.subr.mxu0 0.0
        %766 = vmatpush1.msra.mxu0 0.0
        %767 = vmatprep.subr.mxu0 0.0
        %768 = vmatpush1.msra.mxu0 0.0
        %769 = vmatprep.subr.mxu0 0.0
        %770 = vmatpush1.msra.mxu0 0.0
        %771 = vmatprep.subr.mxu0 0.0
        %772 = vmatpush1.msra.mxu0 0.0
        %773 = vmatprep.subr.mxu0 0.0
        %774 = vmatpush1.msra.mxu0 0.0
        %775 = vmatprep.subr.mxu0 0.0
        %776 = vmatpush1.msra.mxu0 0.0
        %777 = vmatprep.subr.mxu0 0.0
        %778 = vmatpush1.msra.mxu0 0.0
        %779 = vmatprep.subr.mxu0 0.0
        %780 = vmatpush1.msra.mxu0 0.0
        %781 = vmatprep.subr.mxu0 0.0
        %782 = vmatpush1.msra.mxu0 0.0
        %783 = vmatprep.subr.mxu0 0.0
        %784 = vmatpush1.msra.mxu0 0.0
        %785 = vmatprep.subr.mxu0 0.0
        %786 = vmatpush1.msra.mxu0 0.0
        %787 = vmatprep.mubr.f32.mxu0 0.0
        %788 = vmatmul.mubr.f32.gmra.mrb[0].mxu0 %v715
        %v789 = vpop.f32.mrb[0].mxu0
        %v790 = vadd.f32 %v711, %v789
        %v791 = vpop.f32.mrb[0].mxu0
        %v792 = vadd.f32 %v711, %v791
        %793 = vdwg.mxu0
        %v796 = vcombine.low %v790, %v792
        %797 = vrot.lane.b32.xlu0 %v796, 17
        %v798 = vpop.permute.xlu0 %797
        %v799 = vrot.slane %v798, 4
        %v800 = vsel %vm378, %v799, %v798
        %803 = vst.msk [vmem:[#allocation2] sm:$0xff] %vm384, %v800
        %804 = vst.msk [vmem:[#allocation2 + $0x8] sm:$0xf] %vm386, %v799
        %v805 = vld [vmem:[#allocation2] sm:$0xff]
        %v806 = vmul.f32 %v805, %v391
        %v808 = vcombine.high %v806, %v806
        %810 = vst [vmem:[#allocation3] sm:$0xf] %v806
        %811 = vst [vmem:[#allocation3 + $0x8] sm:$0xf] %v808
        %v812 = vld [vmem:[#allocation2] sm:$0xff]
        %v813 = vld [vmem:[#allocation2 + $0x8] sm:$0xf]
        %v816 = vcombine.low %v812, %v812
        %v817 = vcombine.low %v813, %v813
        %818 = vrot.lane.b32.xlu0 %v816, 127
        %v819 = vpop.permute.xlu0 %818
        %820 = vrot.lane.b32.xlu0 %v812, 127
        %v821 = vpop.permute.xlu0 %820
        %822 = vrot.lane.b32.xlu0 %v817, 127
        %v823 = vpop.permute.xlu0 %822
        %v824 = vsel %vm411, %v819, %v821
        %v825 = vsel %vm411, %v821, %v823
        %828 = vst [vmem:[#allocation3] sm:$0xf0] %v824
        %829 = vst [vmem:[#allocation3 + $0x8] sm:$0xf0] %v825
        %v830 = vld [vmem:[#allocation2] sm:$0xff]
        %v831 = vld [vmem:[#allocation2 + $0x8] sm:$0xf]
        %v832 = vmul.f32 %v830, %v427
        %v833 = vmul.f32 %v831, %v425
        %v836 = vcombine.high %v832, %v832
        %837 = vrot.lane.b32.xlu0 %v832, 126
        %v838 = vpop.permute.xlu0 %837
        %839 = vrot.lane.b32.xlu0 %v836, 126
        %v840 = vpop.permute.xlu0 %839
        %841 = vrot.lane.b32.xlu0 %v833, 126
        %v842 = vpop.permute.xlu0 %841
        %v843 = vsel %vm441, %v838, %v840
        %v844 = vsel %vm441, %v840, %v842
        %847 = vst [vmem:[#allocation3 + $0x10] sm:$0xf] %v843
        %848 = vst [vmem:[#allocation3 + $0x18] sm:$0xf] %v844
        %v849 = vld [vmem:[#allocation2] sm:$0xff]
        %v850 = vld [vmem:[#allocation2 + $0x8] sm:$0xf]
        %v851 = vmul.f32 %v849, %v454
        %v852 = vmul.f32 %v850, %v452
        %v855 = vcombine.low %v851, %v851
        %v856 = vcombine.low %v852, %v852
        %857 = vrot.lane.b32.xlu0 %v855, 112
        %v858 = vpop.permute.xlu0 %857
        %859 = vrot.lane.b32.xlu0 %v851, 112
        %v860 = vpop.permute.xlu0 %859
        %861 = vrot.lane.b32.xlu0 %v856, 112
        %v862 = vpop.permute.xlu0 %861
        %v863 = vsel %vm469, %v858, %v860
        %v864 = vsel %vm469, %v860, %v862
        %867 = vst [vmem:[#allocation3 + $0x10] sm:$0xf0] %v863
        %868 = vst [vmem:[#allocation3 + $0x18] sm:$0xf0] %v864
        %v869 = vld [vmem:[#allocation2] sm:$0xff]
        %v870 = vld [vmem:[#allocation2 + $0x8] sm:$0xf]
        %v873 = vcombine.high %v869, %v869
        %874 = vrot.lane.b32.xlu0 %v869, 111
        %v875 = vpop.permute.xlu0 %874
        %876 = vrot.lane.b32.xlu0 %v873, 111
        %v877 = vpop.permute.xlu0 %876
        %878 = vrot.lane.b32.xlu0 %v870, 111
        %v879 = vpop.permute.xlu0 %878
        %v880 = vsel %vm487, %v875, %v877
        %v881 = vsel %vm487, %v877, %v879
        %884 = vst [vmem:[#allocation3 + $0x20] sm:$0xf] %v880
        %885 = vst [vmem:[#allocation3 + $0x28] sm:$0xf] %v881
        %v886 = vld [vmem:[#allocation2] sm:$0xff]
        %v887 = vld [vmem:[#allocation2 + $0x8] sm:$0xf]
        %v888 = vmul.f32 %v886, %v500
        %v889 = vmul.f32 %v887, %v498
        %v892 = vcombine.low %v888, %v888
        %v893 = vcombine.low %v889, %v889
        %894 = vrot.lane.b32.xlu0 %v892, 110
        %v895 = vpop.permute.xlu0 %894
        %896 = vrot.lane.b32.xlu0 %v888, 110
        %v897 = vpop.permute.xlu0 %896
        %898 = vrot.lane.b32.xlu0 %v893, 110
        %v899 = vpop.permute.xlu0 %898
        %v900 = vsel %vm515, %v895, %v897
        %v901 = vsel %vm515, %v897, %v899
        %904 = vst [vmem:[#allocation3 + $0x20] sm:$0xf0] %v900
        %905 = vst [vmem:[#allocation3 + $0x28] sm:$0xf0] %v901
        %v906 = vld [vmem:[#allocation2] sm:$0xff]
        %v907 = vld [vmem:[#allocation2 + $0x8] sm:$0xf]
        %v908 = vmul.f32 %v906, %v528
        %v909 = vmul.f32 %v907, %v526
        %v912 = vcombine.high %v908, %v908
        %913 = vrot.lane.b32.xlu0 %v908, 96
        %v914 = vpop.permute.xlu0 %913
        %915 = vrot.lane.b32.xlu0 %v912, 96
        %v916 = vpop.permute.xlu0 %915
        %917 = vrot.lane.b32.xlu0 %v909, 96
        %v918 = vpop.permute.xlu0 %917
        %v919 = vsel %vm542, %v914, %v916
        %v920 = vsel %vm542, %v916, %v918
        %923 = vst [vmem:[#allocation3 + $0x30] sm:$0xf] %v919
        %924 = vst [vmem:[#allocation3 + $0x38] sm:$0xf] %v920
        %v925 = vld [vmem:[#allocation2] sm:$0xff]
        %v926 = vld [vmem:[#allocation2 + $0x8] sm:$0xf]
        %v929 = vcombine.low %v925, %v925
        %v930 = vcombine.low %v926, %v926
        %931 = vrot.lane.b32.xlu0 %v929, 95
        %v932 = vpop.permute.xlu0 %931
        %933 = vrot.lane.b32.xlu0 %v925, 95
        %v934 = vpop.permute.xlu0 %933
        %935 = vrot.lane.b32.xlu0 %v930, 95
        %v936 = vpop.permute.xlu0 %935
        %v937 = vsel %vm561, %v932, %v934
        %v938 = vsel %vm561, %v934, %v936
        %941 = vst [vmem:[#allocation3 + $0x30] sm:$0xf0] %v937
        %942 = vst [vmem:[#allocation3 + $0x38] sm:$0xf0] %v938
        %v943 = vld [vmem:[#allocation2] sm:$0xff]
        %v944 = vld [vmem:[#allocation2 + $0x8] sm:$0xf]
        %v945 = vmul.f32 %v943, %v574
        %v946 = vmul.f32 %v944, %v572
        %v949 = vcombine.high %v945, %v945
        %950 = vrot.lane.b32.xlu0 %v945, 94
        %v951 = vpop.permute.xlu0 %950
        %952 = vrot.lane.b32.xlu0 %v949, 94
        %v953 = vpop.permute.xlu0 %952
        %954 = vrot.lane.b32.xlu0 %v946, 94
        %v955 = vpop.permute.xlu0 %954
        %v956 = vsel %vm588, %v951, %v953
        %v957 = vsel %vm588, %v953, %v955
        %960 = vst [vmem:[#allocation3 + $0x40] sm:$0xf] %v956
        %961 = vst [vmem:[#allocation3 + $0x48] sm:$0xf] %v957
        %v962 = vld [vmem:[%s6] sm:$0xf]
        %v963 = vld [vmem:[#allocation3] sm:$0xff]
        %v964 = vld [vmem:[#allocation3 + $0x8] sm:$0xff]
        %v965 = vld [vmem:[#allocation3 + $0x10] sm:$0xff]
        %v966 = vld [vmem:[#allocation3 + $0x18] sm:$0xff]
        %v967 = vld [vmem:[#allocation3 + $0x20] sm:$0xff]
        %v968 = vld [vmem:[#allocation3 + $0x28] sm:$0xff]
        %v969 = vld [vmem:[#allocation3 + $0x30] sm:$0xff]
        %v970 = vld [vmem:[#allocation3 + $0x38] sm:$0xff]
        %v971 = vld [vmem:[#allocation3 + $0x40] sm:$0xf]
        %v972 = vld [vmem:[#allocation3 + $0x48] sm:$0xf]
        %v974 = vsel %vm606, %v962, 0
        %v977 = vsel %vm610, %v971, 0
        %v980 = vsel %vm610, %v972, 0
        %982 = vmatprep.subr.mxu0 %v964
        %983 = vmatpush1.msra.mxu0 %v963
        %984 = vmatprep.subr.mxu0 %v966
        %985 = vmatpush1.msra.mxu0 %v965
        %986 = vmatprep.subr.mxu0 %v968
        %987 = vmatpush1.msra.mxu0 %v967
        %988 = vmatprep.subr.mxu0 %v970
        %989 = vmatpush1.msra.mxu0 %v969
        %990 = vmatprep.subr.mxu0 %v980
        %991 = vmatpush1.msra.mxu0 %v977
        %992 = vmatprep.subr.mxu0 0.0
        %993 = vmatpush1.msra.mxu0 0.0
        %994 = vmatprep.subr.mxu0 0.0
        %995 = vmatpush1.msra.mxu0 0.0
        %996 = vmatprep.subr.mxu0 0.0
        %997 = vmatpush1.msra.mxu0 0.0
        %998 = vmatprep.subr.mxu0 0.0
        %999 = vmatpush1.msra.mxu0 0.0
        %1000 = vmatprep.subr.mxu0 0.0
        %1001 = vmatpush1.msra.mxu0 0.0
        %1002 = vmatprep.subr.mxu0 0.0
        %1003 = vmatpush1.msra.mxu0 0.0
        %1004 = vmatprep.subr.mxu0 0.0
        %1005 = vmatpush1.msra.mxu0 0.0
        %1006 = vmatprep.subr.mxu0 0.0
        %1007 = vmatpush1.msra.mxu0 0.0
        %1008 = vmatprep.subr.mxu0 0.0
        %1009 = vmatpush1.msra.mxu0 0.0
        %1010 = vmatprep.subr.mxu0 0.0
        %1011 = vmatpush1.msra.mxu0 0.0
        %1012 = vmatprep.subr.mxu0 0.0
        %1013 = vmatpush1.msra.mxu0 0.0
        %1014 = vmatprep.subr.mxu0 0.0
        %1015 = vmatpush1.msra.mxu0 0.0
        %1016 = vmatprep.subr.mxu0 0.0
        %1017 = vmatpush1.msra.mxu0 0.0
        %1018 = vmatprep.subr.mxu0 0.0
        %1019 = vmatpush1.msra.mxu0 0.0
        %1020 = vmatprep.subr.mxu0 0.0
        %1021 = vmatpush1.msra.mxu0 0.0
        %1022 = vmatprep.subr.mxu0 0.0
        %1023 = vmatpush1.msra.mxu0 0.0
        %1024 = vmatprep.subr.mxu0 0.0
        %1025 = vmatpush1.msra.mxu0 0.0
        %1026 = vmatprep.subr.mxu0 0.0
        %1027 = vmatpush1.msra.mxu0 0.0
        %1028 = vmatprep.subr.mxu0 0.0
        %1029 = vmatpush1.msra.mxu0 0.0
        %1030 = vmatprep.subr.mxu0 0.0
        %1031 = vmatpush1.msra.mxu0 0.0
        %1032 = vmatprep.subr.mxu0 0.0
        %1033 = vmatpush1.msra.mxu0 0.0
        %1034 = vmatprep.subr.mxu0 0.0
        %1035 = vmatpush1.msra.mxu0 0.0
        %1036 = vmatprep.subr.mxu0 0.0
        %1037 = vmatpush1.msra.mxu0 0.0
        %1038 = vmatprep.subr.mxu0 0.0
        %1039 = vmatpush1.msra.mxu0 0.0
        %1040 = vmatprep.subr.mxu0 0.0
        %1041 = vmatpush1.msra.mxu0 0.0
        %1042 = vmatprep.subr.mxu0 0.0
        %1043 = vmatpush1.msra.mxu0 0.0
        %1044 = vmatprep.subr.mxu0 0.0
        %1045 = vmatpush1.msra.mxu0 0.0
        %1046 = vmatprep.mubr.f32.mxu0 0.0
        %1047 = vmatmul.mubr.f32.gmra.mrb[0].mxu0 %v974
        %v1048 = vpop.f32.mrb[0].mxu0
        %v1049 = vadd.f32 0.0, %v1048
        %v1050 = vpop.f32.mrb[0].mxu0
        %v1051 = vadd.f32 0.0, %v1050
        %1052 = vdwg.mxu0
        %v1053 = vld [vmem:[%s7] sm:$0xf]
        %1055 = vset.pattern.permute.xlu0 0
        %1056 = vperm.xlu0 %1055, %v1053
        %v1057 = vpop.permute.xlu0 %1056
        %v1059 = vmul.f32 %v1049, %v1057
        %v1060 = vmul.f32 %v1051, %v1057
        %v1061 = vld [vmem:[%s8] sm:$0xf]
        %1063 = vset.pattern.permute.xlu0 0
        %1064 = vperm.xlu0 %1063, %v1061
        %v1065 = vpop.permute.xlu0 %1064
        %v1067 = vadd.f32 %v1059, %v1065
        %v1068 = vadd.f32 %v1060, %v1065
        %v1069 = vmax.f32 %v1067, 0.0
        %v1070 = vmax.f32 %v1068, 0.0
        %v1071 = vcombine.high %v370, %v370
        %v1073 = vadd.f32 %v1069, %v370
        %v1074 = vadd.f32 %v1070, %v1071
        %v1077 = vcombine.low %v1073, %v1074
        %1079 = vst [vmem:[%s325] sm:$0xff] %v1077
        %s1080 = sand.u32 %s225, 1
        %s1081 = scalar_lea.sflag [#allocation5], %s1080
        %s1082 = sand.u32 %s225, 1
        %s1083 = smul.addr %s1082, 8
        %s1084 = scalar_lea.vmem [#allocation4], %s1083
        // Predicated region
        $region57: #{tpu_custom_call.1} parent=55 // pred_check
          %p1085 = pneg %p235
        $region58: #{tpu_custom_call.1} parent=55 // pred_check_branch
          %1087 = sbr.rel (%p1085) target = $region60
        $region59: #{tpu_custom_call.1} parent=55 // pred_region
          %s1089 = ssub.s32 128, 128
          %1090 = vsyncadd %s1081, %s1089
          %s1091 = smul.addr %s23, 2
          %s1092 = smul.addr %s1091, 64
          %s1093 = scalar_lea.hbm %s9, %s1092
          %s1095 = sshll.u32 %s1084, 4
          %s1096 = int_to_ptr.vmem [resolvable:$true] %s1095
          %1098 = dma.vmem_to_hbm [thread:$0]  %s1096, 128, %s1093, %s1081
        $region60: #{tpu_custom_call.1} parent=55 // pred_fallthru
          _
      $region56: #{tpu_custom_call.1} parent=5 // pred_fallthru
        _
      %p1099 = scmp.le.s32.totalorder 2, %s18
      // Predicated region
      $region61: #{tpu_custom_call.1} parent=5 // pred_check
        %p1100 = pneg %p1099
      $region62: #{tpu_custom_call.1} parent=5 // pred_check_branch
        %1102 = sbr.rel (%p1100) target = $region64
      $region63: #{tpu_custom_call.1} parent=5 // pred_region
        %s1103 = ssub.s32 %s18, 2
        // Predicated region
        $region65: #{tpu_custom_call.1} parent=63 // pred_check
          %p1104 = pneg %p241
        $region66: #{tpu_custom_call.1} parent=63 // pred_check_branch
          %1106 = sbr.rel (%p1104) target = $region68
        $region67: #{tpu_custom_call.1} parent=63 // pred_region
          %s1107 = sand.u32 %s226, 1
          %s1108 = scalar_lea.sflag [#allocation5], %s1107
          %s1109 = sand.u32 %s226, 1
          %s1110 = smul.addr %s1109, 8
          %s1111 = scalar_lea.vmem [#allocation4], %s1110
          %1112 = dma.done %s1108, 128
        $region68: #{tpu_custom_call.1} parent=63 // pred_fallthru
          _
      $region64: #{tpu_custom_call.1} parent=5 // pred_fallthru
        _
    $region6: #{tpu_custom_call.1} parent=1 // loop_footer
      %s22 = sadd.s32 1, %s18
    $region7: #{tpu_custom_call.1} parent=1 // loop_footer_branch
      %17 = sbr.rel target = $region3
    $region8: #{tpu_custom_call.1} parent=1 // loop_exit
      _
    %1113 = vsyncpa [#allocation5], 1
    %s1114 = scalar_lea.sflag [#allocation5], 1
    %1115 = vsyncpa %s1114, 1

</llo_original>
